<compile_context>
chip_gen: v6e
topology: v6e:2x2x1
jax: 0.10.0
libtpu: 0.0.40
codegen_flags: <defaults>
</compile_context>

<pallas_src>
import functools

import jax
import jax.numpy as jnp
from jax.experimental import pallas as pl
from jax.experimental.pallas import tpu as pltpu


def _cnn_kernel(w1_ref, b1_ref, w2_ref, b2_ref, x_ref, o_ref, *,
                c_in, c_hidden, c_out):
    # w1_ref: SMEM (c_hidden*c_in,)  conv1 weight, row-major (h, c)
    # b1_ref: SMEM (c_hidden,)
    # w2_ref: SMEM (c_out*c_hidden,) conv2 weight, row-major (o, h)
    # b2_ref: SMEM (c_out,)
    # x_ref:  VMEM (1, c_in, TS)     spatial tile, lane-dense on TS
    # o_ref:  VMEM (1, c_out, TS)
    x = x_ref[0]  # (c_in, TS) f32

    # conv1 + ReLU: hidden[h] = relu(b1[h] + sum_c w1[h,c] * x[c])
    hidden = []
    for h in range(c_hidden):
        acc = x[0:1, :] * w1_ref[h * c_in]
        for c in range(1, c_in):
            acc = acc + x[c:c + 1, :] * w1_ref[h * c_in + c]
        hidden.append(jnp.maximum(acc + b1_ref[h], 0.0))

    # conv2: y[o] = b2[o] + sum_h w2[o,h] * hidden[h]
    outs = []
    for o in range(c_out):
        acc = hidden[0] * w2_ref[o * c_hidden]
        for h in range(1, c_hidden):
            acc = acc + hidden[h] * w2_ref[o * c_hidden + h]
        outs.append(acc + b2_ref[o])

    # Single lane-dense, unmasked store of the whole (c_out, TS) tile.
    o_ref[0] = jnp.concatenate(outs, axis=0).astype(o_ref.dtype)


def _choose_spatial_tile(s, cap):
    """Largest tile <= cap that is a multiple of 128 and divides s (no padding)."""
    if s <= cap:
        return s
    ts = (cap // 128) * 128
    while ts >= 128:
        if s % ts == 0:
            return ts
        ts -= 128
    return s  # fall back to the full spatial extent as a single block


@functools.partial(jax.jit, static_argnames=("max_tile",))
def cnn_forward(x_nchw, w1, b1, w2, b2, *, max_tile=32768):
    """Equivalent of CNN.forward for NCHW input.

    x_nchw : (N, C_in, H, W) float32
    w1     : (C_hidden, C_in)   -- PyTorch conv1.weight squeezed (1x1 kernel)
    b1     : (C_hidden,)
    w2     : (C_out, C_hidden)  -- PyTorch conv2.weight squeezed
    b2     : (C_out,)
    returns: (N, C_out, H, W) float32
    """
    N, C_in, H, W = x_nchw.shape
    C_hidden = w1.shape[0]
    C_out = w2.shape[0]
    S = H * W

    # Free contiguous view: NCHW -> (N, C_in, H*W). No transpose, no pad.
    x3 = x_nchw.reshape(N, C_in, S).astype(jnp.float32)

    ts = _choose_spatial_tile(S, max_tile)
    grid = (N, S // ts)

    # Tiny weights/biases flattened for scalar reads from SMEM.
    w1_flat = w1.reshape(C_hidden * C_in).astype(jnp.float32)
    w2_flat = w2.reshape(C_out * C_hidden).astype(jnp.float32)
    b1_f = b1.reshape(C_hidden).astype(jnp.float32)
    b2_f = b2.reshape(C_out).astype(jnp.float32)

    flops = 2 * N * S * (C_in * C_hidden + C_hidden * C_out)
    bytes_accessed = 4 * (N * S * (C_in + C_out)
                          + w1_flat.size + w2_flat.size + b1_f.size + b2_f.size)

    kernel = functools.partial(
        _cnn_kernel, c_in=C_in, c_hidden=C_hidden, c_out=C_out)

    smem_spec = pl.BlockSpec(memory_space=pltpu.MemorySpace.SMEM)

    out3 = pl.pallas_call(
        kernel,
        out_shape=jax.ShapeDtypeStruct((N, C_out, S), jnp.float32),
        grid=grid,
        in_specs=[
            smem_spec,  # w1
            smem_spec,  # b1
            smem_spec,  # w2
            smem_spec,  # b2
            pl.BlockSpec((1, C_in, ts), lambda n, s: (n, 0, s)),
        ],
        out_specs=pl.BlockSpec((1, C_out, ts), lambda n, s: (n, 0, s)),
        compiler_params=pltpu.CompilerParams(
            dimension_semantics=("parallel", "parallel"),
        ),
        cost_estimate=pl.CostEstimate(
            flops=int(flops), transcendentals=0,
            bytes_accessed=int(bytes_accessed)),
    )(w1_flat, b1_f, w2_flat, b2_f, x3)

    # Free contiguous view back to NCHW.
    return out3.reshape(N, C_out, H, W)


def init_params(key, in_channels, out_channels):
    """Deterministic synthetic parameters matching the PyTorch module shapes.

    conv1.weight: (2*in_channels, in_channels, 1, 1) -> stored squeezed
    conv2.weight: (out_channels, 2*in_channels, 1, 1) -> stored squeezed
    """
    hidden = in_channels * 2
    k1, k2, k3, k4 = jax.random.split(key, 4)
    w1 = jax.random.normal(k1, (hidden, in_channels), dtype=jnp.float32) * 0.1
    b1 = jax.random.normal(k2, (hidden,), dtype=jnp.float32) * 0.1
    w2 = jax.random.normal(k3, (out_channels, hidden), dtype=jnp.float32) * 0.1
    b2 = jax.random.normal(k4, (out_channels,), dtype=jnp.float32) * 0.1
    return w1, b1, w2, b2


def _reference_forward(x_nchw, w1, b1, w2, b2):
    # Pure-JAX reference: 1x1 convs as einsum over channels (NCHW semantics).
    h = jnp.einsum("nchw,oc->nohw", x_nchw, w1) + b1[None, :, None, None]
    h = jnp.maximum(h, 0.0)
    y = jnp.einsum("nchw,oc->nohw", h, w2) + b2[None, :, None, None]
    return y


if __name__ == "__main__":
    key = jax.random.PRNGKey(0)
    kx, kp = jax.random.split(key)

    N, C_in, H, W = 2, 4, 16, 16
    C_out = 8

    x = jax.random.normal(kx, (N, C_in, H, W), dtype=jnp.float32)
    w1, b1, w2, b2 = init_params(kp, C_in, C_out)

    out = cnn_forward(x, w1, b1, w2, b2)
    out = jax.block_until_ready(out)

    ref = _reference_forward(x, w1, b1, w2, b2)
    assert out.shape == (N, C_out, H, W), out.shape
    assert jnp.allclose(out, ref, atol=1e-5, rtol=1e-5), "mismatch vs reference"

    print("KERNEL_OK")
</pallas_src>

<mosaic_0001>
module attributes {stable_mosaic.version = 11 : i64} {
  func.func @_cnn_kernel(%arg0: i32, %arg1: i32, %arg2: memref<32xf32, #tpu.memory_space<smem>>, %arg3: memref<8xf32, #tpu.memory_space<smem>>, %arg4: memref<64xf32, #tpu.memory_space<smem>>, %arg5: memref<8xf32, #tpu.memory_space<smem>>, %arg6: memref<1x4x256xf32, #tpu.memory_space<vmem>>, %arg7: memref<1x8x256xf32, #tpu.memory_space<vmem>>) attributes {dimension_semantics = [#tpu.dimension_semantics<parallel>, #tpu.dimension_semantics<parallel>], iteration_bounds = array<i64: 2, 1>, scalar_prefetch = 0 : i64, scratch_operands = 0 : i64, tpu.core_type = #tpu.core_type<tc>, window_params = [{transform_indices = @transform_0, window_bounds = array<i64: 32>}, {transform_indices = @transform_1, window_bounds = array<i64: 8>}, {transform_indices = @transform_2, window_bounds = array<i64: 64>}, {transform_indices = @transform_3, window_bounds = array<i64: 8>}, {transform_indices = @transform_4, window_bounds = array<i64: 1, 4, 256>}, {transform_indices = @transform_5, window_bounds = array<i64: 1, 8, 256>}]} {
    %c0 = arith.constant 0 : index
    %c0_0 = arith.constant 0 : index
    %c0_1 = arith.constant 0 : index
    %0 = vector.load %arg6[%c0, %c0_0, %c0_1] : memref<1x4x256xf32, #tpu.memory_space<vmem>>, vector<1x4x256xf32>
    %1 = vector.shape_cast %0 : vector<1x4x256xf32> to vector<4x256xf32>
    %2 = vector.extract_strided_slice %1 {offsets = [0, 0], sizes = [1, 256], strides = [1, 1]} : vector<4x256xf32> to vector<1x256xf32>
    %c0_2 = arith.constant 0 : index
    %3 = memref.load %arg2[%c0_2] : memref<32xf32, #tpu.memory_space<smem>>
    %4 = vector.broadcast %3 : f32 to vector<1x256xf32>
    %5 = arith.mulf %2, %4 : vector<1x256xf32>
    %6 = vector.extract_strided_slice %1 {offsets = [1, 0], sizes = [1, 256], strides = [1, 1]} : vector<4x256xf32> to vector<1x256xf32>
    %c1 = arith.constant 1 : index
    %7 = memref.load %arg2[%c1] : memref<32xf32, #tpu.memory_space<smem>>
    %8 = vector.broadcast %7 : f32 to vector<1x256xf32>
    %9 = arith.mulf %6, %8 : vector<1x256xf32>
    %10 = arith.addf %5, %9 : vector<1x256xf32>
    %11 = vector.extract_strided_slice %1 {offsets = [2, 0], sizes = [1, 256], strides = [1, 1]} : vector<4x256xf32> to vector<1x256xf32>
    %c2 = arith.constant 2 : index
    %12 = memref.load %arg2[%c2] : memref<32xf32, #tpu.memory_space<smem>>
    %13 = vector.broadcast %12 : f32 to vector<1x256xf32>
    %14 = arith.mulf %11, %13 : vector<1x256xf32>
    %15 = arith.addf %10, %14 : vector<1x256xf32>
    %16 = vector.extract_strided_slice %1 {offsets = [3, 0], sizes = [1, 256], strides = [1, 1]} : vector<4x256xf32> to vector<1x256xf32>
    %c3 = arith.constant 3 : index
    %17 = memref.load %arg2[%c3] : memref<32xf32, #tpu.memory_space<smem>>
    %18 = vector.broadcast %17 : f32 to vector<1x256xf32>
    %19 = arith.mulf %16, %18 : vector<1x256xf32>
    %20 = arith.addf %15, %19 : vector<1x256xf32>
    %c0_3 = arith.constant 0 : index
    %21 = memref.load %arg3[%c0_3] : memref<8xf32, #tpu.memory_space<smem>>
    %22 = vector.broadcast %21 : f32 to vector<1x256xf32>
    %23 = arith.addf %20, %22 : vector<1x256xf32>
    %cst = arith.constant 0.000000e+00 : f32
    %24 = vector.broadcast %cst : f32 to vector<1x256xf32>
    %25 = arith.maximumf %23, %24 : vector<1x256xf32>
    %26 = vector.extract_strided_slice %1 {offsets = [0, 0], sizes = [1, 256], strides = [1, 1]} : vector<4x256xf32> to vector<1x256xf32>
    %c4 = arith.constant 4 : index
    %27 = memref.load %arg2[%c4] : memref<32xf32, #tpu.memory_space<smem>>
    %28 = vector.broadcast %27 : f32 to vector<1x256xf32>
    %29 = arith.mulf %26, %28 : vector<1x256xf32>
    %30 = vector.extract_strided_slice %1 {offsets = [1, 0], sizes = [1, 256], strides = [1, 1]} : vector<4x256xf32> to vector<1x256xf32>
    %c5 = arith.constant 5 : index
    %31 = memref.load %arg2[%c5] : memref<32xf32, #tpu.memory_space<smem>>
    %32 = vector.broadcast %31 : f32 to vector<1x256xf32>
    %33 = arith.mulf %30, %32 : vector<1x256xf32>
    %34 = arith.addf %29, %33 : vector<1x256xf32>
    %35 = vector.extract_strided_slice %1 {offsets = [2, 0], sizes = [1, 256], strides = [1, 1]} : vector<4x256xf32> to vector<1x256xf32>
    %c6 = arith.constant 6 : index
    %36 = memref.load %arg2[%c6] : memref<32xf32, #tpu.memory_space<smem>>
    %37 = vector.broadcast %36 : f32 to vector<1x256xf32>
    %38 = arith.mulf %35, %37 : vector<1x256xf32>
    %39 = arith.addf %34, %38 : vector<1x256xf32>
    %40 = vector.extract_strided_slice %1 {offsets = [3, 0], sizes = [1, 256], strides = [1, 1]} : vector<4x256xf32> to vector<1x256xf32>
    %c7 = arith.constant 7 : index
    %41 = memref.load %arg2[%c7] : memref<32xf32, #tpu.memory_space<smem>>
    %42 = vector.broadcast %41 : f32 to vector<1x256xf32>
    %43 = arith.mulf %40, %42 : vector<1x256xf32>
    %44 = arith.addf %39, %43 : vector<1x256xf32>
    %c1_4 = arith.constant 1 : index
    %45 = memref.load %arg3[%c1_4] : memref<8xf32, #tpu.memory_space<smem>>
    %46 = vector.broadcast %45 : f32 to vector<1x256xf32>
    %47 = arith.addf %44, %46 : vector<1x256xf32>
    %cst_5 = arith.constant 0.000000e+00 : f32
    %48 = vector.broadcast %cst_5 : f32 to vector<1x256xf32>
    %49 = arith.maximumf %47, %48 : vector<1x256xf32>
    %50 = vector.extract_strided_slice %1 {offsets = [0, 0], sizes = [1, 256], strides = [1, 1]} : vector<4x256xf32> to vector<1x256xf32>
    %c8 = arith.constant 8 : index
    %51 = memref.load %arg2[%c8] : memref<32xf32, #tpu.memory_space<smem>>
    %52 = vector.broadcast %51 : f32 to vector<1x256xf32>
    %53 = arith.mulf %50, %52 : vector<1x256xf32>
    %54 = vector.extract_strided_slice %1 {offsets = [1, 0], sizes = [1, 256], strides = [1, 1]} : vector<4x256xf32> to vector<1x256xf32>
    %c9 = arith.constant 9 : index
    %55 = memref.load %arg2[%c9] : memref<32xf32, #tpu.memory_space<smem>>
    %56 = vector.broadcast %55 : f32 to vector<1x256xf32>
    %57 = arith.mulf %54, %56 : vector<1x256xf32>
    %58 = arith.addf %53, %57 : vector<1x256xf32>
    %59 = vector.extract_strided_slice %1 {offsets = [2, 0], sizes = [1, 256], strides = [1, 1]} : vector<4x256xf32> to vector<1x256xf32>
    %c10 = arith.constant 10 : index
    %60 = memref.load %arg2[%c10] : memref<32xf32, #tpu.memory_space<smem>>
    %61 = vector.broadcast %60 : f32 to vector<1x256xf32>
    %62 = arith.mulf %59, %61 : vector<1x256xf32>
    %63 = arith.addf %58, %62 : vector<1x256xf32>
    %64 = vector.extract_strided_slice %1 {offsets = [3, 0], sizes = [1, 256], strides = [1, 1]} : vector<4x256xf32> to vector<1x256xf32>
    %c11 = arith.constant 11 : index
    %65 = memref.load %arg2[%c11] : memref<32xf32, #tpu.memory_space<smem>>
    %66 = vector.broadcast %65 : f32 to vector<1x256xf32>
    %67 = arith.mulf %64, %66 : vector<1x256xf32>
    %68 = arith.addf %63, %67 : vector<1x256xf32>
    %c2_6 = arith.constant 2 : index
    %69 = memref.load %arg3[%c2_6] : memref<8xf32, #tpu.memory_space<smem>>
    %70 = vector.broadcast %69 : f32 to vector<1x256xf32>
    %71 = arith.addf %68, %70 : vector<1x256xf32>
    %cst_7 = arith.constant 0.000000e+00 : f32
    %72 = vector.broadcast %cst_7 : f32 to vector<1x256xf32>
    %73 = arith.maximumf %71, %72 : vector<1x256xf32>
    %74 = vector.extract_strided_slice %1 {offsets = [0, 0], sizes = [1, 256], strides = [1, 1]} : vector<4x256xf32> to vector<1x256xf32>
    %c12 = arith.constant 12 : index
    %75 = memref.load %arg2[%c12] : memref<32xf32, #tpu.memory_space<smem>>
    %76 = vector.broadcast %75 : f32 to vector<1x256xf32>
    %77 = arith.mulf %74, %76 : vector<1x256xf32>
    %78 = vector.extract_strided_slice %1 {offsets = [1, 0], sizes = [1, 256], strides = [1, 1]} : vector<4x256xf32> to vector<1x256xf32>
    %c13 = arith.constant 13 : index
    %79 = memref.load %arg2[%c13] : memref<32xf32, #tpu.memory_space<smem>>
    %80 = vector.broadcast %79 : f32 to vector<1x256xf32>
    %81 = arith.mulf %78, %80 : vector<1x256xf32>
    %82 = arith.addf %77, %81 : vector<1x256xf32>
    %83 = vector.extract_strided_slice %1 {offsets = [2, 0], sizes = [1, 256], strides = [1, 1]} : vector<4x256xf32> to vector<1x256xf32>
    %c14 = arith.constant 14 : index
    %84 = memref.load %arg2[%c14] : memref<32xf32, #tpu.memory_space<smem>>
    %85 = vector.broadcast %84 : f32 to vector<1x256xf32>
    %86 = arith.mulf %83, %85 : vector<1x256xf32>
    %87 = arith.addf %82, %86 : vector<1x256xf32>
    %88 = vector.extract_strided_slice %1 {offsets = [3, 0], sizes = [1, 256], strides = [1, 1]} : vector<4x256xf32> to vector<1x256xf32>
    %c15 = arith.constant 15 : index
    %89 = memref.load %arg2[%c15] : memref<32xf32, #tpu.memory_space<smem>>
    %90 = vector.broadcast %89 : f32 to vector<1x256xf32>
    %91 = arith.mulf %88, %90 : vector<1x256xf32>
    %92 = arith.addf %87, %91 : vector<1x256xf32>
    %c3_8 = arith.constant 3 : index
    %93 = memref.load %arg3[%c3_8] : memref<8xf32, #tpu.memory_space<smem>>
    %94 = vector.broadcast %93 : f32 to vector<1x256xf32>
    %95 = arith.addf %92, %94 : vector<1x256xf32>
    %cst_9 = arith.constant 0.000000e+00 : f32
    %96 = vector.broadcast %cst_9 : f32 to vector<1x256xf32>
    %97 = arith.maximumf %95, %96 : vector<1x256xf32>
    %98 = vector.extract_strided_slice %1 {offsets = [0, 0], sizes = [1, 256], strides = [1, 1]} : vector<4x256xf32> to vector<1x256xf32>
    %c16 = arith.constant 16 : index
    %99 = memref.load %arg2[%c16] : memref<32xf32, #tpu.memory_space<smem>>
    %100 = vector.broadcast %99 : f32 to vector<1x256xf32>
    %101 = arith.mulf %98, %100 : vector<1x256xf32>
    %102 = vector.extract_strided_slice %1 {offsets = [1, 0], sizes = [1, 256], strides = [1, 1]} : vector<4x256xf32> to vector<1x256xf32>
    %c17 = arith.constant 17 : index
    %103 = memref.load %arg2[%c17] : memref<32xf32, #tpu.memory_space<smem>>
    %104 = vector.broadcast %103 : f32 to vector<1x256xf32>
    %105 = arith.mulf %102, %104 : vector<1x256xf32>
    %106 = arith.addf %101, %105 : vector<1x256xf32>
    %107 = vector.extract_strided_slice %1 {offsets = [2, 0], sizes = [1, 256], strides = [1, 1]} : vector<4x256xf32> to vector<1x256xf32>
    %c18 = arith.constant 18 : index
    %108 = memref.load %arg2[%c18] : memref<32xf32, #tpu.memory_space<smem>>
    %109 = vector.broadcast %108 : f32 to vector<1x256xf32>
    %110 = arith.mulf %107, %109 : vector<1x256xf32>
    %111 = arith.addf %106, %110 : vector<1x256xf32>
    %112 = vector.extract_strided_slice %1 {offsets = [3, 0], sizes = [1, 256], strides = [1, 1]} : vector<4x256xf32> to vector<1x256xf32>
    %c19 = arith.constant 19 : index
    %113 = memref.load %arg2[%c19] : memref<32xf32, #tpu.memory_space<smem>>
    %114 = vector.broadcast %113 : f32 to vector<1x256xf32>
    %115 = arith.mulf %112, %114 : vector<1x256xf32>
    %116 = arith.addf %111, %115 : vector<1x256xf32>
    %c4_10 = arith.constant 4 : index
    %117 = memref.load %arg3[%c4_10] : memref<8xf32, #tpu.memory_space<smem>>
    %118 = vector.broadcast %117 : f32 to vector<1x256xf32>
    %119 = arith.addf %116, %118 : vector<1x256xf32>
    %cst_11 = arith.constant 0.000000e+00 : f32
    %120 = vector.broadcast %cst_11 : f32 to vector<1x256xf32>
    %121 = arith.maximumf %119, %120 : vector<1x256xf32>
    %122 = vector.extract_strided_slice %1 {offsets = [0, 0], sizes = [1, 256], strides = [1, 1]} : vector<4x256xf32> to vector<1x256xf32>
    %c20 = arith.constant 20 : index
    %123 = memref.load %arg2[%c20] : memref<32xf32, #tpu.memory_space<smem>>
    %124 = vector.broadcast %123 : f32 to vector<1x256xf32>
    %125 = arith.mulf %122, %124 : vector<1x256xf32>
    %126 = vector.extract_strided_slice %1 {offsets = [1, 0], sizes = [1, 256], strides = [1, 1]} : vector<4x256xf32> to vector<1x256xf32>
    %c21 = arith.constant 21 : index
    %127 = memref.load %arg2[%c21] : memref<32xf32, #tpu.memory_space<smem>>
    %128 = vector.broadcast %127 : f32 to vector<1x256xf32>
    %129 = arith.mulf %126, %128 : vector<1x256xf32>
    %130 = arith.addf %125, %129 : vector<1x256xf32>
    %131 = vector.extract_strided_slice %1 {offsets = [2, 0], sizes = [1, 256], strides = [1, 1]} : vector<4x256xf32> to vector<1x256xf32>
    %c22 = arith.constant 22 : index
    %132 = memref.load %arg2[%c22] : memref<32xf32, #tpu.memory_space<smem>>
    %133 = vector.broadcast %132 : f32 to vector<1x256xf32>
    %134 = arith.mulf %131, %133 : vector<1x256xf32>
    %135 = arith.addf %130, %134 : vector<1x256xf32>
    %136 = vector.extract_strided_slice %1 {offsets = [3, 0], sizes = [1, 256], strides = [1, 1]} : vector<4x256xf32> to vector<1x256xf32>
    %c23 = arith.constant 23 : index
    %137 = memref.load %arg2[%c23] : memref<32xf32, #tpu.memory_space<smem>>
    %138 = vector.broadcast %137 : f32 to vector<1x256xf32>
    %139 = arith.mulf %136, %138 : vector<1x256xf32>
    %140 = arith.addf %135, %139 : vector<1x256xf32>
    %c5_12 = arith.constant 5 : index
    %141 = memref.load %arg3[%c5_12] : memref<8xf32, #tpu.memory_space<smem>>
    %142 = vector.broadcast %141 : f32 to vector<1x256xf32>
    %143 = arith.addf %140, %142 : vector<1x256xf32>
    %cst_13 = arith.constant 0.000000e+00 : f32
    %144 = vector.broadcast %cst_13 : f32 to vector<1x256xf32>
    %145 = arith.maximumf %143, %144 : vector<1x256xf32>
    %146 = vector.extract_strided_slice %1 {offsets = [0, 0], sizes = [1, 256], strides = [1, 1]} : vector<4x256xf32> to vector<1x256xf32>
    %c24 = arith.constant 24 : index
    %147 = memref.load %arg2[%c24] : memref<32xf32, #tpu.memory_space<smem>>
    %148 = vector.broadcast %147 : f32 to vector<1x256xf32>
    %149 = arith.mulf %146, %148 : vector<1x256xf32>
    %150 = vector.extract_strided_slice %1 {offsets = [1, 0], sizes = [1, 256], strides = [1, 1]} : vector<4x256xf32> to vector<1x256xf32>
    %c25 = arith.constant 25 : index
    %151 = memref.load %arg2[%c25] : memref<32xf32, #tpu.memory_space<smem>>
    %152 = vector.broadcast %151 : f32 to vector<1x256xf32>
    %153 = arith.mulf %150, %152 : vector<1x256xf32>
    %154 = arith.addf %149, %153 : vector<1x256xf32>
    %155 = vector.extract_strided_slice %1 {offsets = [2, 0], sizes = [1, 256], strides = [1, 1]} : vector<4x256xf32> to vector<1x256xf32>
    %c26 = arith.constant 26 : index
    %156 = memref.load %arg2[%c26] : memref<32xf32, #tpu.memory_space<smem>>
    %157 = vector.broadcast %156 : f32 to vector<1x256xf32>
    %158 = arith.mulf %155, %157 : vector<1x256xf32>
    %159 = arith.addf %154, %158 : vector<1x256xf32>
    %160 = vector.extract_strided_slice %1 {offsets = [3, 0], sizes = [1, 256], strides = [1, 1]} : vector<4x256xf32> to vector<1x256xf32>
    %c27 = arith.constant 27 : index
    %161 = memref.load %arg2[%c27] : memref<32xf32, #tpu.memory_space<smem>>
    %162 = vector.broadcast %161 : f32 to vector<1x256xf32>
    %163 = arith.mulf %160, %162 : vector<1x256xf32>
    %164 = arith.addf %159, %163 : vector<1x256xf32>
    %c6_14 = arith.constant 6 : index
    %165 = memref.load %arg3[%c6_14] : memref<8xf32, #tpu.memory_space<smem>>
    %166 = vector.broadcast %165 : f32 to vector<1x256xf32>
    %167 = arith.addf %164, %166 : vector<1x256xf32>
    %cst_15 = arith.constant 0.000000e+00 : f32
    %168 = vector.broadcast %cst_15 : f32 to vector<1x256xf32>
    %169 = arith.maximumf %167, %168 : vector<1x256xf32>
    %170 = vector.extract_strided_slice %1 {offsets = [0, 0], sizes = [1, 256], strides = [1, 1]} : vector<4x256xf32> to vector<1x256xf32>
    %c28 = arith.constant 28 : index
    %171 = memref.load %arg2[%c28] : memref<32xf32, #tpu.memory_space<smem>>
    %172 = vector.broadcast %171 : f32 to vector<1x256xf32>
    %173 = arith.mulf %170, %172 : vector<1x256xf32>
    %174 = vector.extract_strided_slice %1 {offsets = [1, 0], sizes = [1, 256], strides = [1, 1]} : vector<4x256xf32> to vector<1x256xf32>
    %c29 = arith.constant 29 : index
    %175 = memref.load %arg2[%c29] : memref<32xf32, #tpu.memory_space<smem>>
    %176 = vector.broadcast %175 : f32 to vector<1x256xf32>
    %177 = arith.mulf %174, %176 : vector<1x256xf32>
    %178 = arith.addf %173, %177 : vector<1x256xf32>
    %179 = vector.extract_strided_slice %1 {offsets = [2, 0], sizes = [1, 256], strides = [1, 1]} : vector<4x256xf32> to vector<1x256xf32>
    %c30 = arith.constant 30 : index
    %180 = memref.load %arg2[%c30] : memref<32xf32, #tpu.memory_space<smem>>
    %181 = vector.broadcast %180 : f32 to vector<1x256xf32>
    %182 = arith.mulf %179, %181 : vector<1x256xf32>
    %183 = arith.addf %178, %182 : vector<1x256xf32>
    %184 = vector.extract_strided_slice %1 {offsets = [3, 0], sizes = [1, 256], strides = [1, 1]} : vector<4x256xf32> to vector<1x256xf32>
    %c31 = arith.constant 31 : index
    %185 = memref.load %arg2[%c31] : memref<32xf32, #tpu.memory_space<smem>>
    %186 = vector.broadcast %185 : f32 to vector<1x256xf32>
    %187 = arith.mulf %184, %186 : vector<1x256xf32>
    %188 = arith.addf %183, %187 : vector<1x256xf32>
    %c7_16 = arith.constant 7 : index
    %189 = memref.load %arg3[%c7_16] : memref<8xf32, #tpu.memory_space<smem>>
    %190 = vector.broadcast %189 : f32 to vector<1x256xf32>
    %191 = arith.addf %188, %190 : vector<1x256xf32>
    %cst_17 = arith.constant 0.000000e+00 : f32
    %192 = vector.broadcast %cst_17 : f32 to vector<1x256xf32>
    %193 = arith.maximumf %191, %192 : vector<1x256xf32>
    %c0_18 = arith.constant 0 : index
    %194 = memref.load %arg4[%c0_18] : memref<64xf32, #tpu.memory_space<smem>>
    %195 = vector.broadcast %194 : f32 to vector<1x256xf32>
    %196 = arith.mulf %25, %195 : vector<1x256xf32>
    %c1_19 = arith.constant 1 : index
    %197 = memref.load %arg4[%c1_19] : memref<64xf32, #tpu.memory_space<smem>>
    %198 = vector.broadcast %197 : f32 to vector<1x256xf32>
    %199 = arith.mulf %49, %198 : vector<1x256xf32>
    %200 = arith.addf %196, %199 : vector<1x256xf32>
    %c2_20 = arith.constant 2 : index
    %201 = memref.load %arg4[%c2_20] : memref<64xf32, #tpu.memory_space<smem>>
    %202 = vector.broadcast %201 : f32 to vector<1x256xf32>
    %203 = arith.mulf %73, %202 : vector<1x256xf32>
    %204 = arith.addf %200, %203 : vector<1x256xf32>
    %c3_21 = arith.constant 3 : index
    %205 = memref.load %arg4[%c3_21] : memref<64xf32, #tpu.memory_space<smem>>
    %206 = vector.broadcast %205 : f32 to vector<1x256xf32>
    %207 = arith.mulf %97, %206 : vector<1x256xf32>
    %208 = arith.addf %204, %207 : vector<1x256xf32>
    %c4_22 = arith.constant 4 : index
    %209 = memref.load %arg4[%c4_22] : memref<64xf32, #tpu.memory_space<smem>>
    %210 = vector.broadcast %209 : f32 to vector<1x256xf32>
    %211 = arith.mulf %121, %210 : vector<1x256xf32>
    %212 = arith.addf %208, %211 : vector<1x256xf32>
    %c5_23 = arith.constant 5 : index
    %213 = memref.load %arg4[%c5_23] : memref<64xf32, #tpu.memory_space<smem>>
    %214 = vector.broadcast %213 : f32 to vector<1x256xf32>
    %215 = arith.mulf %145, %214 : vector<1x256xf32>
    %216 = arith.addf %212, %215 : vector<1x256xf32>
    %c6_24 = arith.constant 6 : index
    %217 = memref.load %arg4[%c6_24] : memref<64xf32, #tpu.memory_space<smem>>
    %218 = vector.broadcast %217 : f32 to vector<1x256xf32>
    %219 = arith.mulf %169, %218 : vector<1x256xf32>
    %220 = arith.addf %216, %219 : vector<1x256xf32>
    %c7_25 = arith.constant 7 : index
    %221 = memref.load %arg4[%c7_25] : memref<64xf32, #tpu.memory_space<smem>>
    %222 = vector.broadcast %221 : f32 to vector<1x256xf32>
    %223 = arith.mulf %193, %222 : vector<1x256xf32>
    %224 = arith.addf %220, %223 : vector<1x256xf32>
    %c0_26 = arith.constant 0 : index
    %225 = memref.load %arg5[%c0_26] : memref<8xf32, #tpu.memory_space<smem>>
    %226 = vector.broadcast %225 : f32 to vector<1x256xf32>
    %227 = arith.addf %224, %226 : vector<1x256xf32>
    %c8_27 = arith.constant 8 : index
    %228 = memref.load %arg4[%c8_27] : memref<64xf32, #tpu.memory_space<smem>>
    %229 = vector.broadcast %228 : f32 to vector<1x256xf32>
    %230 = arith.mulf %25, %229 : vector<1x256xf32>
    %c9_28 = arith.constant 9 : index
    %231 = memref.load %arg4[%c9_28] : memref<64xf32, #tpu.memory_space<smem>>
    %232 = vector.broadcast %231 : f32 to vector<1x256xf32>
    %233 = arith.mulf %49, %232 : vector<1x256xf32>
    %234 = arith.addf %230, %233 : vector<1x256xf32>
    %c10_29 = arith.constant 10 : index
    %235 = memref.load %arg4[%c10_29] : memref<64xf32, #tpu.memory_space<smem>>
    %236 = vector.broadcast %235 : f32 to vector<1x256xf32>
    %237 = arith.mulf %73, %236 : vector<1x256xf32>
    %238 = arith.addf %234, %237 : vector<1x256xf32>
    %c11_30 = arith.constant 11 : index
    %239 = memref.load %arg4[%c11_30] : memref<64xf32, #tpu.memory_space<smem>>
    %240 = vector.broadcast %239 : f32 to vector<1x256xf32>
    %241 = arith.mulf %97, %240 : vector<1x256xf32>
    %242 = arith.addf %238, %241 : vector<1x256xf32>
    %c12_31 = arith.constant 12 : index
    %243 = memref.load %arg4[%c12_31] : memref<64xf32, #tpu.memory_space<smem>>
    %244 = vector.broadcast %243 : f32 to vector<1x256xf32>
    %245 = arith.mulf %121, %244 : vector<1x256xf32>
    %246 = arith.addf %242, %245 : vector<1x256xf32>
    %c13_32 = arith.constant 13 : index
    %247 = memref.load %arg4[%c13_32] : memref<64xf32, #tpu.memory_space<smem>>
    %248 = vector.broadcast %247 : f32 to vector<1x256xf32>
    %249 = arith.mulf %145, %248 : vector<1x256xf32>
    %250 = arith.addf %246, %249 : vector<1x256xf32>
    %c14_33 = arith.constant 14 : index
    %251 = memref.load %arg4[%c14_33] : memref<64xf32, #tpu.memory_space<smem>>
    %252 = vector.broadcast %251 : f32 to vector<1x256xf32>
    %253 = arith.mulf %169, %252 : vector<1x256xf32>
    %254 = arith.addf %250, %253 : vector<1x256xf32>
    %c15_34 = arith.constant 15 : index
    %255 = memref.load %arg4[%c15_34] : memref<64xf32, #tpu.memory_space<smem>>
    %256 = vector.broadcast %255 : f32 to vector<1x256xf32>
    %257 = arith.mulf %193, %256 : vector<1x256xf32>
    %258 = arith.addf %254, %257 : vector<1x256xf32>
    %c1_35 = arith.constant 1 : index
    %259 = memref.load %arg5[%c1_35] : memref<8xf32, #tpu.memory_space<smem>>
    %260 = vector.broadcast %259 : f32 to vector<1x256xf32>
    %261 = arith.addf %258, %260 : vector<1x256xf32>
    %c16_36 = arith.constant 16 : index
    %262 = memref.load %arg4[%c16_36] : memref<64xf32, #tpu.memory_space<smem>>
    %263 = vector.broadcast %262 : f32 to vector<1x256xf32>
    %264 = arith.mulf %25, %263 : vector<1x256xf32>
    %c17_37 = arith.constant 17 : index
    %265 = memref.load %arg4[%c17_37] : memref<64xf32, #tpu.memory_space<smem>>
    %266 = vector.broadcast %265 : f32 to vector<1x256xf32>
    %267 = arith.mulf %49, %266 : vector<1x256xf32>
    %268 = arith.addf %264, %267 : vector<1x256xf32>
    %c18_38 = arith.constant 18 : index
    %269 = memref.load %arg4[%c18_38] : memref<64xf32, #tpu.memory_space<smem>>
    %270 = vector.broadcast %269 : f32 to vector<1x256xf32>
    %271 = arith.mulf %73, %270 : vector<1x256xf32>
    %272 = arith.addf %268, %271 : vector<1x256xf32>
    %c19_39 = arith.constant 19 : index
    %273 = memref.load %arg4[%c19_39] : memref<64xf32, #tpu.memory_space<smem>>
    %274 = vector.broadcast %273 : f32 to vector<1x256xf32>
    %275 = arith.mulf %97, %274 : vector<1x256xf32>
    %276 = arith.addf %272, %275 : vector<1x256xf32>
    %c20_40 = arith.constant 20 : index
    %277 = memref.load %arg4[%c20_40] : memref<64xf32, #tpu.memory_space<smem>>
    %278 = vector.broadcast %277 : f32 to vector<1x256xf32>
    %279 = arith.mulf %121, %278 : vector<1x256xf32>
    %280 = arith.addf %276, %279 : vector<1x256xf32>
    %c21_41 = arith.constant 21 : index
    %281 = memref.load %arg4[%c21_41] : memref<64xf32, #tpu.memory_space<smem>>
    %282 = vector.broadcast %281 : f32 to vector<1x256xf32>
    %283 = arith.mulf %145, %282 : vector<1x256xf32>
    %284 = arith.addf %280, %283 : vector<1x256xf32>
    %c22_42 = arith.constant 22 : index
    %285 = memref.load %arg4[%c22_42] : memref<64xf32, #tpu.memory_space<smem>>
    %286 = vector.broadcast %285 : f32 to vector<1x256xf32>
    %287 = arith.mulf %169, %286 : vector<1x256xf32>
    %288 = arith.addf %284, %287 : vector<1x256xf32>
    %c23_43 = arith.constant 23 : index
    %289 = memref.load %arg4[%c23_43] : memref<64xf32, #tpu.memory_space<smem>>
    %290 = vector.broadcast %289 : f32 to vector<1x256xf32>
    %291 = arith.mulf %193, %290 : vector<1x256xf32>
    %292 = arith.addf %288, %291 : vector<1x256xf32>
    %c2_44 = arith.constant 2 : index
    %293 = memref.load %arg5[%c2_44] : memref<8xf32, #tpu.memory_space<smem>>
    %294 = vector.broadcast %293 : f32 to vector<1x256xf32>
    %295 = arith.addf %292, %294 : vector<1x256xf32>
    %c24_45 = arith.constant 24 : index
    %296 = memref.load %arg4[%c24_45] : memref<64xf32, #tpu.memory_space<smem>>
    %297 = vector.broadcast %296 : f32 to vector<1x256xf32>
    %298 = arith.mulf %25, %297 : vector<1x256xf32>
    %c25_46 = arith.constant 25 : index
    %299 = memref.load %arg4[%c25_46] : memref<64xf32, #tpu.memory_space<smem>>
    %300 = vector.broadcast %299 : f32 to vector<1x256xf32>
    %301 = arith.mulf %49, %300 : vector<1x256xf32>
    %302 = arith.addf %298, %301 : vector<1x256xf32>
    %c26_47 = arith.constant 26 : index
    %303 = memref.load %arg4[%c26_47] : memref<64xf32, #tpu.memory_space<smem>>
    %304 = vector.broadcast %303 : f32 to vector<1x256xf32>
    %305 = arith.mulf %73, %304 : vector<1x256xf32>
    %306 = arith.addf %302, %305 : vector<1x256xf32>
    %c27_48 = arith.constant 27 : index
    %307 = memref.load %arg4[%c27_48] : memref<64xf32, #tpu.memory_space<smem>>
    %308 = vector.broadcast %307 : f32 to vector<1x256xf32>
    %309 = arith.mulf %97, %308 : vector<1x256xf32>
    %310 = arith.addf %306, %309 : vector<1x256xf32>
    %c28_49 = arith.constant 28 : index
    %311 = memref.load %arg4[%c28_49] : memref<64xf32, #tpu.memory_space<smem>>
    %312 = vector.broadcast %311 : f32 to vector<1x256xf32>
    %313 = arith.mulf %121, %312 : vector<1x256xf32>
    %314 = arith.addf %310, %313 : vector<1x256xf32>
    %c29_50 = arith.constant 29 : index
    %315 = memref.load %arg4[%c29_50] : memref<64xf32, #tpu.memory_space<smem>>
    %316 = vector.broadcast %315 : f32 to vector<1x256xf32>
    %317 = arith.mulf %145, %316 : vector<1x256xf32>
    %318 = arith.addf %314, %317 : vector<1x256xf32>
    %c30_51 = arith.constant 30 : index
    %319 = memref.load %arg4[%c30_51] : memref<64xf32, #tpu.memory_space<smem>>
    %320 = vector.broadcast %319 : f32 to vector<1x256xf32>
    %321 = arith.mulf %169, %320 : vector<1x256xf32>
    %322 = arith.addf %318, %321 : vector<1x256xf32>
    %c31_52 = arith.constant 31 : index
    %323 = memref.load %arg4[%c31_52] : memref<64xf32, #tpu.memory_space<smem>>
    %324 = vector.broadcast %323 : f32 to vector<1x256xf32>
    %325 = arith.mulf %193, %324 : vector<1x256xf32>
    %326 = arith.addf %322, %325 : vector<1x256xf32>
    %c3_53 = arith.constant 3 : index
    %327 = memref.load %arg5[%c3_53] : memref<8xf32, #tpu.memory_space<smem>>
    %328 = vector.broadcast %327 : f32 to vector<1x256xf32>
    %329 = arith.addf %326, %328 : vector<1x256xf32>
    %c32 = arith.constant 32 : index
    %330 = memref.load %arg4[%c32] : memref<64xf32, #tpu.memory_space<smem>>
    %331 = vector.broadcast %330 : f32 to vector<1x256xf32>
    %332 = arith.mulf %25, %331 : vector<1x256xf32>
    %c33 = arith.constant 33 : index
    %333 = memref.load %arg4[%c33] : memref<64xf32, #tpu.memory_space<smem>>
    %334 = vector.broadcast %333 : f32 to vector<1x256xf32>
    %335 = arith.mulf %49, %334 : vector<1x256xf32>
    %336 = arith.addf %332, %335 : vector<1x256xf32>
    %c34 = arith.constant 34 : index
    %337 = memref.load %arg4[%c34] : memref<64xf32, #tpu.memory_space<smem>>
    %338 = vector.broadcast %337 : f32 to vector<1x256xf32>
    %339 = arith.mulf %73, %338 : vector<1x256xf32>
    %340 = arith.addf %336, %339 : vector<1x256xf32>
    %c35 = arith.constant 35 : index
    %341 = memref.load %arg4[%c35] : memref<64xf32, #tpu.memory_space<smem>>
    %342 = vector.broadcast %341 : f32 to vector<1x256xf32>
    %343 = arith.mulf %97, %342 : vector<1x256xf32>
    %344 = arith.addf %340, %343 : vector<1x256xf32>
    %c36 = arith.constant 36 : index
    %345 = memref.load %arg4[%c36] : memref<64xf32, #tpu.memory_space<smem>>
    %346 = vector.broadcast %345 : f32 to vector<1x256xf32>
    %347 = arith.mulf %121, %346 : vector<1x256xf32>
    %348 = arith.addf %344, %347 : vector<1x256xf32>
    %c37 = arith.constant 37 : index
    %349 = memref.load %arg4[%c37] : memref<64xf32, #tpu.memory_space<smem>>
    %350 = vector.broadcast %349 : f32 to vector<1x256xf32>
    %351 = arith.mulf %145, %350 : vector<1x256xf32>
    %352 = arith.addf %348, %351 : vector<1x256xf32>
    %c38 = arith.constant 38 : index
    %353 = memref.load %arg4[%c38] : memref<64xf32, #tpu.memory_space<smem>>
    %354 = vector.broadcast %353 : f32 to vector<1x256xf32>
    %355 = arith.mulf %169, %354 : vector<1x256xf32>
    %356 = arith.addf %352, %355 : vector<1x256xf32>
    %c39 = arith.constant 39 : index
    %357 = memref.load %arg4[%c39] : memref<64xf32, #tpu.memory_space<smem>>
    %358 = vector.broadcast %357 : f32 to vector<1x256xf32>
    %359 = arith.mulf %193, %358 : vector<1x256xf32>
    %360 = arith.addf %356, %359 : vector<1x256xf32>
    %c4_54 = arith.constant 4 : index
    %361 = memref.load %arg5[%c4_54] : memref<8xf32, #tpu.memory_space<smem>>
    %362 = vector.broadcast %361 : f32 to vector<1x256xf32>
    %363 = arith.addf %360, %362 : vector<1x256xf32>
    %c40 = arith.constant 40 : index
    %364 = memref.load %arg4[%c40] : memref<64xf32, #tpu.memory_space<smem>>
    %365 = vector.broadcast %364 : f32 to vector<1x256xf32>
    %366 = arith.mulf %25, %365 : vector<1x256xf32>
    %c41 = arith.constant 41 : index
    %367 = memref.load %arg4[%c41] : memref<64xf32, #tpu.memory_space<smem>>
    %368 = vector.broadcast %367 : f32 to vector<1x256xf32>
    %369 = arith.mulf %49, %368 : vector<1x256xf32>
    %370 = arith.addf %366, %369 : vector<1x256xf32>
    %c42 = arith.constant 42 : index
    %371 = memref.load %arg4[%c42] : memref<64xf32, #tpu.memory_space<smem>>
    %372 = vector.broadcast %371 : f32 to vector<1x256xf32>
    %373 = arith.mulf %73, %372 : vector<1x256xf32>
    %374 = arith.addf %370, %373 : vector<1x256xf32>
    %c43 = arith.constant 43 : index
    %375 = memref.load %arg4[%c43] : memref<64xf32, #tpu.memory_space<smem>>
    %376 = vector.broadcast %375 : f32 to vector<1x256xf32>
    %377 = arith.mulf %97, %376 : vector<1x256xf32>
    %378 = arith.addf %374, %377 : vector<1x256xf32>
    %c44 = arith.constant 44 : index
    %379 = memref.load %arg4[%c44] : memref<64xf32, #tpu.memory_space<smem>>
    %380 = vector.broadcast %379 : f32 to vector<1x256xf32>
    %381 = arith.mulf %121, %380 : vector<1x256xf32>
    %382 = arith.addf %378, %381 : vector<1x256xf32>
    %c45 = arith.constant 45 : index
    %383 = memref.load %arg4[%c45] : memref<64xf32, #tpu.memory_space<smem>>
    %384 = vector.broadcast %383 : f32 to vector<1x256xf32>
    %385 = arith.mulf %145, %384 : vector<1x256xf32>
    %386 = arith.addf %382, %385 : vector<1x256xf32>
    %c46 = arith.constant 46 : index
    %387 = memref.load %arg4[%c46] : memref<64xf32, #tpu.memory_space<smem>>
    %388 = vector.broadcast %387 : f32 to vector<1x256xf32>
    %389 = arith.mulf %169, %388 : vector<1x256xf32>
    %390 = arith.addf %386, %389 : vector<1x256xf32>
    %c47 = arith.constant 47 : index
    %391 = memref.load %arg4[%c47] : memref<64xf32, #tpu.memory_space<smem>>
    %392 = vector.broadcast %391 : f32 to vector<1x256xf32>
    %393 = arith.mulf %193, %392 : vector<1x256xf32>
    %394 = arith.addf %390, %393 : vector<1x256xf32>
    %c5_55 = arith.constant 5 : index
    %395 = memref.load %arg5[%c5_55] : memref<8xf32, #tpu.memory_space<smem>>
    %396 = vector.broadcast %395 : f32 to vector<1x256xf32>
    %397 = arith.addf %394, %396 : vector<1x256xf32>
    %c48 = arith.constant 48 : index
    %398 = memref.load %arg4[%c48] : memref<64xf32, #tpu.memory_space<smem>>
    %399 = vector.broadcast %398 : f32 to vector<1x256xf32>
    %400 = arith.mulf %25, %399 : vector<1x256xf32>
    %c49 = arith.constant 49 : index
    %401 = memref.load %arg4[%c49] : memref<64xf32, #tpu.memory_space<smem>>
    %402 = vector.broadcast %401 : f32 to vector<1x256xf32>
    %403 = arith.mulf %49, %402 : vector<1x256xf32>
    %404 = arith.addf %400, %403 : vector<1x256xf32>
    %c50 = arith.constant 50 : index
    %405 = memref.load %arg4[%c50] : memref<64xf32, #tpu.memory_space<smem>>
    %406 = vector.broadcast %405 : f32 to vector<1x256xf32>
    %407 = arith.mulf %73, %406 : vector<1x256xf32>
    %408 = arith.addf %404, %407 : vector<1x256xf32>
    %c51 = arith.constant 51 : index
    %409 = memref.load %arg4[%c51] : memref<64xf32, #tpu.memory_space<smem>>
    %410 = vector.broadcast %409 : f32 to vector<1x256xf32>
    %411 = arith.mulf %97, %410 : vector<1x256xf32>
    %412 = arith.addf %408, %411 : vector<1x256xf32>
    %c52 = arith.constant 52 : index
    %413 = memref.load %arg4[%c52] : memref<64xf32, #tpu.memory_space<smem>>
    %414 = vector.broadcast %413 : f32 to vector<1x256xf32>
    %415 = arith.mulf %121, %414 : vector<1x256xf32>
    %416 = arith.addf %412, %415 : vector<1x256xf32>
    %c53 = arith.constant 53 : index
    %417 = memref.load %arg4[%c53] : memref<64xf32, #tpu.memory_space<smem>>
    %418 = vector.broadcast %417 : f32 to vector<1x256xf32>
    %419 = arith.mulf %145, %418 : vector<1x256xf32>
    %420 = arith.addf %416, %419 : vector<1x256xf32>
    %c54 = arith.constant 54 : index
    %421 = memref.load %arg4[%c54] : memref<64xf32, #tpu.memory_space<smem>>
    %422 = vector.broadcast %421 : f32 to vector<1x256xf32>
    %423 = arith.mulf %169, %422 : vector<1x256xf32>
    %424 = arith.addf %420, %423 : vector<1x256xf32>
    %c55 = arith.constant 55 : index
    %425 = memref.load %arg4[%c55] : memref<64xf32, #tpu.memory_space<smem>>
    %426 = vector.broadcast %425 : f32 to vector<1x256xf32>
    %427 = arith.mulf %193, %426 : vector<1x256xf32>
    %428 = arith.addf %424, %427 : vector<1x256xf32>
    %c6_56 = arith.constant 6 : index
    %429 = memref.load %arg5[%c6_56] : memref<8xf32, #tpu.memory_space<smem>>
    %430 = vector.broadcast %429 : f32 to vector<1x256xf32>
    %431 = arith.addf %428, %430 : vector<1x256xf32>
    %c56 = arith.constant 56 : index
    %432 = memref.load %arg4[%c56] : memref<64xf32, #tpu.memory_space<smem>>
    %433 = vector.broadcast %432 : f32 to vector<1x256xf32>
    %434 = arith.mulf %25, %433 : vector<1x256xf32>
    %c57 = arith.constant 57 : index
    %435 = memref.load %arg4[%c57] : memref<64xf32, #tpu.memory_space<smem>>
    %436 = vector.broadcast %435 : f32 to vector<1x256xf32>
    %437 = arith.mulf %49, %436 : vector<1x256xf32>
    %438 = arith.addf %434, %437 : vector<1x256xf32>
    %c58 = arith.constant 58 : index
    %439 = memref.load %arg4[%c58] : memref<64xf32, #tpu.memory_space<smem>>
    %440 = vector.broadcast %439 : f32 to vector<1x256xf32>
    %441 = arith.mulf %73, %440 : vector<1x256xf32>
    %442 = arith.addf %438, %441 : vector<1x256xf32>
    %c59 = arith.constant 59 : index
    %443 = memref.load %arg4[%c59] : memref<64xf32, #tpu.memory_space<smem>>
    %444 = vector.broadcast %443 : f32 to vector<1x256xf32>
    %445 = arith.mulf %97, %444 : vector<1x256xf32>
    %446 = arith.addf %442, %445 : vector<1x256xf32>
    %c60 = arith.constant 60 : index
    %447 = memref.load %arg4[%c60] : memref<64xf32, #tpu.memory_space<smem>>
    %448 = vector.broadcast %447 : f32 to vector<1x256xf32>
    %449 = arith.mulf %121, %448 : vector<1x256xf32>
    %450 = arith.addf %446, %449 : vector<1x256xf32>
    %c61 = arith.constant 61 : index
    %451 = memref.load %arg4[%c61] : memref<64xf32, #tpu.memory_space<smem>>
    %452 = vector.broadcast %451 : f32 to vector<1x256xf32>
    %453 = arith.mulf %145, %452 : vector<1x256xf32>
    %454 = arith.addf %450, %453 : vector<1x256xf32>
    %c62 = arith.constant 62 : index
    %455 = memref.load %arg4[%c62] : memref<64xf32, #tpu.memory_space<smem>>
    %456 = vector.broadcast %455 : f32 to vector<1x256xf32>
    %457 = arith.mulf %169, %456 : vector<1x256xf32>
    %458 = arith.addf %454, %457 : vector<1x256xf32>
    %c63 = arith.constant 63 : index
    %459 = memref.load %arg4[%c63] : memref<64xf32, #tpu.memory_space<smem>>
    %460 = vector.broadcast %459 : f32 to vector<1x256xf32>
    %461 = arith.mulf %193, %460 : vector<1x256xf32>
    %462 = arith.addf %458, %461 : vector<1x256xf32>
    %c7_57 = arith.constant 7 : index
    %463 = memref.load %arg5[%c7_57] : memref<8xf32, #tpu.memory_space<smem>>
    %464 = vector.broadcast %463 : f32 to vector<1x256xf32>
    %465 = arith.addf %462, %464 : vector<1x256xf32>
    %466 = tpu.concatenate %227, %261, %295, %329, %363, %397, %431, %465 in 0 : vector<1x256xf32>, vector<1x256xf32>, vector<1x256xf32>, vector<1x256xf32>, vector<1x256xf32>, vector<1x256xf32>, vector<1x256xf32>, vector<1x256xf32> -> vector<8x256xf32>
    %c0_58 = arith.constant 0 : index
    %c0_59 = arith.constant 0 : index
    %c0_60 = arith.constant 0 : index
    %467 = vector.load %arg7[%c0_58, %c0_59, %c0_60] : memref<1x8x256xf32, #tpu.memory_space<vmem>>, vector<1x8x256xf32>
    %468 = vector.shape_cast %467 : vector<1x8x256xf32> to vector<8x256xf32>
    %469 = vector.shape_cast %466 : vector<8x256xf32> to vector<1x8x256xf32>
    tpu.vector_store %arg7[%c0_58, %c0_59, %c0_60], %469 {strides = array<i32>} : memref<1x8x256xf32, #tpu.memory_space<vmem>>, vector<1x8x256xf32>,
    return
  }
  func.func @transform_0(%arg0: i32, %arg1: i32) -> i32 {
    %c0_i32 = arith.constant 0 : i32
    %c0_i32_0 = arith.constant 0 : i32
    return %c0_i32 : i32
  }
  func.func @transform_1(%arg0: i32, %arg1: i32) -> i32 {
    %c0_i32 = arith.constant 0 : i32
    %c0_i32_0 = arith.constant 0 : i32
    return %c0_i32 : i32
  }
  func.func @transform_2(%arg0: i32, %arg1: i32) -> i32 {
    %c0_i32 = arith.constant 0 : i32
    %c0_i32_0 = arith.constant 0 : i32
    return %c0_i32 : i32
  }
  func.func @transform_3(%arg0: i32, %arg1: i32) -> i32 {
    %c0_i32 = arith.constant 0 : i32
    %c0_i32_0 = arith.constant 0 : i32
    return %c0_i32 : i32
  }
  func.func @transform_4(%arg0: i32, %arg1: i32) -> (i32, i32, i32) {
    %c0_i32 = arith.constant 0 : i32
    %c0_i32_0 = arith.constant 0 : i32
    return %arg0, %c0_i32, %arg1 : i32, i32, i32
  }
  func.func @transform_5(%arg0: i32, %arg1: i32) -> (i32, i32, i32) {
    %c0_i32 = arith.constant 0 : i32
    %c0_i32_0 = arith.constant 0 : i32
    return %arg0, %c0_i32, %arg1 : i32, i32, i32
  }
}

</mosaic_0001>

<llo_original>
// kernel: cnn_forward.1
$region0: #{cnn_forward.1}
  #allocation0 [shape = 'u32[]', space=smem, size = 0x4, offset = 0x4, fixed_abs, tag = 'smem constant byte address 0x4 - core index']
  #allocation1 [shape = 'u32[144,128]{1,0:T(1,128)}', space=vmem, size = 0x12000, scoped, tag = 'internal scratch']
  %s0 = inlined_call_operand.vmem [shape: f32[32], index: 0, kind: input, shape index: {}]
  %s1 = inlined_call_operand.vmem [shape: f32[8], index: 1, kind: input, shape index: {}]
  %s2 = inlined_call_operand.vmem [shape: f32[64], index: 2, kind: input, shape index: {}]
  %s3 = inlined_call_operand.vmem [shape: f32[8], index: 3, kind: input, shape index: {}]
  %s4 = inlined_call_operand.vmem [shape: f32[2,4,256], index: 4, kind: input, shape index: {}]
  %s5 = inlined_call_operand.vmem [shape: f32[2,8,256], index: 5, kind: output, shape index: {}]
  %s6 = sld [smem:[#allocation0]]
  $region69: #{cnn_forward.1} parent=0
    _
  %s8 = ssub.s32 1, %s6
  %s9 = scalar_select 0, %s8, %s6
  $region1: #{cnn_forward.1} parent=0
    #allocation2 [shape = 'u8[512]{0}', space=smem, size = 0x200, scoped, tag = 'input window, operand 0, single buffered']
    #allocation3 [shape = 's32[2]{0}', space=sflag, size = 0x8, scoped, tag = 'scoped memory for cnn_forward.1']
    #allocation4 [shape = 'u8[512]{0}', space=smem, size = 0x200, scoped, tag = 'input window, operand 1, single buffered']
    #allocation5 [shape = 's32[1]{0}', space=sflag, size = 0x4, scoped, tag = 'scoped memory for cnn_forward.1']
    #allocation6 [shape = 'u8[512]{0}', space=smem, size = 0x200, scoped, tag = 'input window, operand 2, single buffered']
    #allocation7 [shape = 'u8[512]{0}', space=smem, size = 0x200, scoped, tag = 'input window, operand 3, single buffered']
    #allocation8 [shape = 's32[1]{0}', space=sflag, size = 0x4, scoped, tag = 'scoped memory for cnn_forward.1']
    %10 = vsyncpa [#allocation3], 0
    %11 = vsyncpa [#allocation5], 0
    %12 = vsyncpa [#allocation8], 0
    loop: start=0, step=1, limit=4
    $region2: #{cnn_forward.1} parent=1 // loop_pre_header
      _
    $region3: #{cnn_forward.1} parent=1 // loop_header
      %s14 = sphi 0, %s18
      %p15 = scmp.ge.s32.totalorder %s14, 4
      %s21 = sphi 0, %s33
      %s22 = sphi 0, %s29
      %s23 = sphi 0, %s21
      %s24 = sphi 0, %s22
      %s25 = sphi 0, %s23
      %s26 = sphi 0, %s24
      %s34 = sphi 0, %s34
      %s36 = sphi 0, %s34
      %s37 = sphi 0, %s36
      %s51 = sphi 0, %s37
      %s55 = sphi 0, %s55
      %s57 = sphi 0, %s55
      %s58 = sphi 0, %s57
      %s72 = sphi 0, %s58
      %s76 = sphi 0, %s76
      %s78 = sphi 0, %s76
      %s79 = sphi 0, %s78
      %s93 = sphi 0, %s79
      %s97 = sphi 0, %s97
      %s99 = sphi 0, %s97
      %s100 = sphi 0, %s99
      %s114 = sphi 0, %s100
      %s122 = sphi 0, %s124
      %s125 = sphi 0, %s122
      %s126 = sphi 0, %s125
      %s142 = sphi 0, %s126
      %s150 = sphi 0, %s152
      %s153 = sphi 0, %s150
      %s154 = sphi 0, %s153
      %s170 = sphi 0, %s154
    $region4: #{cnn_forward.1} parent=1 // loop_header_branch
      %17 = sbr.rel (%p15) target = $region8
    $region5: #{cnn_forward.1} parent=1 // loop_body
      %s19 = ssub.s32 %s14, 1
      %s20 = ssub.s32 %s14, 2
      %s27 = sadd.s32 1, %s22
      %p28 = scmp.ge.s32.totalorder %s27, 1
      %s29 = scalar_select %p28, 0, %s27
      %s30 = sadd.s32 1, %s21
      %s31 = scalar_select %p28, %s30, %s21
      %p32 = scmp.ge.s32.totalorder %s31, 2
      %s33 = scalar_select %p32, 0, %s31
      %s35 = sadd.s32 %s34, 1
      %p38 = scmp.eq.s32.totalorder %s14, 1
      %p39 = scmp.ne.s32.totalorder %s34, %s36
      %p40 = scmp.eq.s32.totalorder %s14, 0
      %p41 = por %p39, %p40
      %p42 = scmp.ne.s32.totalorder %s34, %s36
      %p43 = scmp.eq.s32.totalorder %s19, 1
      %p44 = por %p42, %p43
      %p45 = scmp.ne.s32.totalorder %s36, %s37
      %p46 = scmp.eq.s32.totalorder %s19, 0
      %p47 = por %p45, %p46
      %p48 = scmp.ne.s32.totalorder %s36, %s37
      %p49 = scmp.eq.s32.totalorder %s20, 1
      %p50 = por %p48, %p49
      %p52 = scmp.ne.s32.totalorder %s37, %s51
      %p53 = scmp.eq.s32.totalorder %s20, 0
      %p54 = por %p52, %p53
      %s56 = sadd.s32 %s55, 1
      %p59 = scmp.eq.s32.totalorder %s14, 1
      %p60 = scmp.ne.s32.totalorder %s55, %s57
      %p61 = scmp.eq.s32.totalorder %s14, 0
      %p62 = por %p60, %p61
      %p63 = scmp.ne.s32.totalorder %s55, %s57
      %p64 = scmp.eq.s32.totalorder %s19, 1
      %p65 = por %p63, %p64
      %p66 = scmp.ne.s32.totalorder %s57, %s58
      %p67 = scmp.eq.s32.totalorder %s19, 0
      %p68 = por %p66, %p67
      %p69 = scmp.ne.s32.totalorder %s57, %s58
      %p70 = scmp.eq.s32.totalorder %s20, 1
      %p71 = por %p69, %p70
      %p73 = scmp.ne.s32.totalorder %s58, %s72
      %p74 = scmp.eq.s32.totalorder %s20, 0
      %p75 = por %p73, %p74
      %s77 = sadd.s32 %s76, 1
      %p80 = scmp.eq.s32.totalorder %s14, 1
      %p81 = scmp.ne.s32.totalorder %s76, %s78
      %p82 = scmp.eq.s32.totalorder %s14, 0
      %p83 = por %p81, %p82
      %p84 = scmp.ne.s32.totalorder %s76, %s78
      %p85 = scmp.eq.s32.totalorder %s19, 1
      %p86 = por %p84, %p85
      %p87 = scmp.ne.s32.totalorder %s78, %s79
      %p88 = scmp.eq.s32.totalorder %s19, 0
      %p89 = por %p87, %p88
      %p90 = scmp.ne.s32.totalorder %s78, %s79
      %p91 = scmp.eq.s32.totalorder %s20, 1
      %p92 = por %p90, %p91
      %p94 = scmp.ne.s32.totalorder %s79, %s93
      %p95 = scmp.eq.s32.totalorder %s20, 0
      %p96 = por %p94, %p95
      %s98 = sadd.s32 %s97, 1
      %p101 = scmp.eq.s32.totalorder %s14, 1
      %p102 = scmp.ne.s32.totalorder %s97, %s99
      %p103 = scmp.eq.s32.totalorder %s14, 0
      %p104 = por %p102, %p103
      %p105 = scmp.ne.s32.totalorder %s97, %s99
      %p106 = scmp.eq.s32.totalorder %s19, 1
      %p107 = por %p105, %p106
      %p108 = scmp.ne.s32.totalorder %s99, %s100
      %p109 = scmp.eq.s32.totalorder %s19, 0
      %p110 = por %p108, %p109
      %p111 = scmp.ne.s32.totalorder %s99, %s100
      %p112 = scmp.eq.s32.totalorder %s20, 1
      %p113 = por %p111, %p112
      %p115 = scmp.ne.s32.totalorder %s100, %s114
      %p116 = scmp.eq.s32.totalorder %s20, 0
      %p117 = por %p115, %p116
      %s118 = ssub.s32 %s21, %s33
      %s119 = ssub.s32 %s22, %s29
      %s120 = sor.u32 %s118, %s119
      %p121 = scmp.eq.s32.totalorder %s120, 0
      %s123 = sadd.s32 %s122, 1
      %s124 = scalar_select %p121, %s122, %s123
      %p127 = pneg %p121
      %p128 = scmp.eq.s32.totalorder %s14, 1
      %p129 = por %p127, %p128
      %p130 = scmp.ne.s32.totalorder %s122, %s125
      %p131 = scmp.eq.s32.totalorder %s14, 0
      %p132 = por %p130, %p131
      %p133 = scmp.ne.s32.totalorder %s122, %s125
      %p134 = scmp.eq.s32.totalorder %s19, 1
      %p135 = por %p133, %p134
      %p136 = scmp.ne.s32.totalorder %s125, %s126
      %p137 = scmp.eq.s32.totalorder %s19, 0
      %p138 = por %p136, %p137
      %p139 = scmp.ne.s32.totalorder %s125, %s126
      %p140 = scmp.eq.s32.totalorder %s20, 1
      %p141 = por %p139, %p140
      %p143 = scmp.ne.s32.totalorder %s126, %s142
      %p144 = scmp.eq.s32.totalorder %s20, 0
      %p145 = por %p143, %p144
      %s146 = ssub.s32 %s21, %s33
      %s147 = ssub.s32 %s22, %s29
      %s148 = sor.u32 %s146, %s147
      %p149 = scmp.eq.s32.totalorder %s148, 0
      %s151 = sadd.s32 %s150, 1
      %s152 = scalar_select %p149, %s150, %s151
      %p155 = pneg %p149
      %p156 = scmp.eq.s32.totalorder %s14, 1
      %p157 = por %p155, %p156
      %p158 = scmp.ne.s32.totalorder %s150, %s153
      %p159 = scmp.eq.s32.totalorder %s14, 0
      %p160 = por %p158, %p159
      %p161 = scmp.ne.s32.totalorder %s150, %s153
      %p162 = scmp.eq.s32.totalorder %s19, 1
      %p163 = por %p161, %p162
      %p164 = scmp.ne.s32.totalorder %s153, %s154
      %p165 = scmp.eq.s32.totalorder %s19, 0
      %p166 = por %p164, %p165
      %p167 = scmp.ne.s32.totalorder %s153, %s154
      %p168 = scmp.eq.s32.totalorder %s20, 1
      %p169 = por %p167, %p168
      %p171 = scmp.ne.s32.totalorder %s154, %s170
      %p172 = scmp.eq.s32.totalorder %s20, 0
      %p173 = por %p171, %p172
      %p174 = scmp.le.s32.totalorder 1, %s14
      %p175 = scmp.lt.s32.totalorder %s14, 3
      %p176 = pnand %p174, %p175
      %p177 = pneg %p176
      // Predicated region
      $region9: #{cnn_forward.1} parent=5 // pred_check
        _
      $region10: #{cnn_forward.1} parent=5 // pred_check_branch
        %179 = sbr.rel (%p176) target = $region12
      $region11: #{cnn_forward.1} parent=5 // pred_region
        %s180 = ssub.s32 %s14, 1
        // Predicated region
        $region13: #{cnn_forward.1} parent=11 // pred_check
          %p181 = pneg %p47
        $region14: #{cnn_forward.1} parent=11 // pred_check_branch
          %183 = sbr.rel (%p181) target = $region16
        $region15: #{cnn_forward.1} parent=11 // pred_region
          %s185 = ssub.s32 16, 16
          %186 = vsyncadd [#allocation3], %s185
          %s188 = sshll.u32 %s0, 4
          %s189 = int_to_ptr.vmem [resolvable:$true] %s188
          %191 = dma.vmem_to_smem %s189, 16, [#allocation2], [#allocation3]
        $region16: #{cnn_forward.1} parent=11 // pred_fallthru
          _
        // Predicated region
        $region17: #{cnn_forward.1} parent=11 // pred_check
          %p192 = pneg %p68
        $region18: #{cnn_forward.1} parent=11 // pred_check_branch
          %194 = sbr.rel (%p192) target = $region20
        $region19: #{cnn_forward.1} parent=11 // pred_region
          %s196 = ssub.s32 16, 16
          %197 = vsyncadd [#allocation5], %s196
          %s199 = sshll.u32 %s1, 4
          %s200 = int_to_ptr.vmem [resolvable:$true] %s199
          %202 = dma.vmem_to_smem %s200, 16, [#allocation4], [#allocation5]
        $region20: #{cnn_forward.1} parent=11 // pred_fallthru
          _
        // Predicated region
        $region21: #{cnn_forward.1} parent=11 // pred_check
          %p203 = pneg %p89
        $region22: #{cnn_forward.1} parent=11 // pred_check_branch
          %205 = sbr.rel (%p203) target = $region24
        $region23: #{cnn_forward.1} parent=11 // pred_region
          %s207 = ssub.s32 16, 16
          %208 = vsyncadd [#allocation5], %s207
          %s210 = sshll.u32 %s2, 4
          %s211 = int_to_ptr.vmem [resolvable:$true] %s210
          %213 = dma.vmem_to_smem %s211, 16, [#allocation6], [#allocation5]
        $region24: #{cnn_forward.1} parent=11 // pred_fallthru
          _
        // Predicated region
        $region25: #{cnn_forward.1} parent=11 // pred_check
          %p214 = pneg %p110
        $region26: #{cnn_forward.1} parent=11 // pred_check_branch
          %216 = sbr.rel (%p214) target = $region28
        $region27: #{cnn_forward.1} parent=11 // pred_region
          %s218 = ssub.s32 16, 16
          %219 = vsyncadd [#allocation8], %s218
          %s221 = sshll.u32 %s3, 4
          %s222 = int_to_ptr.vmem [resolvable:$true] %s221
          %224 = dma.vmem_to_smem %s222, 16, [#allocation7], [#allocation8]
        $region28: #{cnn_forward.1} parent=11 // pred_fallthru
          _
      $region12: #{cnn_forward.1} parent=5 // pred_fallthru
        _
      %p225 = scmp.lt.s32.totalorder %s14, 2
      // Predicated region
      $region29: #{cnn_forward.1} parent=5 // pred_check
        %p226 = pneg %p225
      $region30: #{cnn_forward.1} parent=5 // pred_check_branch
        %228 = sbr.rel (%p226) target = $region32
      $region31: #{cnn_forward.1} parent=5 // pred_region
        // Predicated region
        $region33: #{cnn_forward.1} parent=31 // pred_check
          %p229 = pneg %p132
        $region34: #{cnn_forward.1} parent=31 // pred_check_branch
          %231 = sbr.rel (%p229) target = $region36
        $region35: #{cnn_forward.1} parent=31 // pred_region
          %s232 = smul.u32 2, %s22
          %p233 = scmp.lt.s32.totalorder %s21, 1
          %s234 = scalar_select %p233, %s21, 1
          %p235 = scmp.lt.s32.totalorder %s232, 1
          %s236 = scalar_select %p235, %s232, 1
          %s237 = smul.addr %s234, 2
          %s238 = sadd.s32 %s236, %s237
          %s239 = smul.addr %s238, 4
          %s240 = scalar_lea.vmem %s4, %s239
          %s241 = smul.u32 2, %s22
        $region36: #{cnn_forward.1} parent=31 // pred_fallthru
          _
      $region32: #{cnn_forward.1} parent=5 // pred_fallthru
        _
      %p242 = scmp.le.s32.totalorder 1, %s14
      %p243 = scmp.lt.s32.totalorder %s14, 3
      %p244 = pnand %p242, %p243
      %p245 = pneg %p244
      // Predicated region
      $region37: #{cnn_forward.1} parent=5 // pred_check
        _
      $region38: #{cnn_forward.1} parent=5 // pred_check_branch
        %247 = sbr.rel (%p244) target = $region40
      $region39: #{cnn_forward.1} parent=5 // pred_region
        %s248 = ssub.s32 %s14, 1
        // Predicated region
        $region41: #{cnn_forward.1} parent=39 // pred_check
          %p249 = pneg %p47
        $region42: #{cnn_forward.1} parent=39 // pred_check_branch
          %251 = sbr.rel (%p249) target = $region44
        $region43: #{cnn_forward.1} parent=39 // pred_region
          %252 = dma.done [#allocation3], 16
        $region44: #{cnn_forward.1} parent=39 // pred_fallthru
          _
        // Predicated region
        $region45: #{cnn_forward.1} parent=39 // pred_check
          %p253 = pneg %p68
        $region46: #{cnn_forward.1} parent=39 // pred_check_branch
          %255 = sbr.rel (%p253) target = $region48
        $region47: #{cnn_forward.1} parent=39 // pred_region
          %256 = dma.done [#allocation5], 16
        $region48: #{cnn_forward.1} parent=39 // pred_fallthru
          _
        // Predicated region
        $region49: #{cnn_forward.1} parent=39 // pred_check
          %p257 = pneg %p89
        $region50: #{cnn_forward.1} parent=39 // pred_check_branch
          %259 = sbr.rel (%p257) target = $region52
        $region51: #{cnn_forward.1} parent=39 // pred_region
          %260 = dma.done [#allocation5], 16
        $region52: #{cnn_forward.1} parent=39 // pred_fallthru
          _
        // Predicated region
        $region53: #{cnn_forward.1} parent=39 // pred_check
          %p261 = pneg %p110
        $region54: #{cnn_forward.1} parent=39 // pred_check_branch
          %263 = sbr.rel (%p261) target = $region56
        $region55: #{cnn_forward.1} parent=39 // pred_region
          %264 = dma.done [#allocation8], 16
        $region56: #{cnn_forward.1} parent=39 // pred_fallthru
          _
        %265 = sfence
        %p266 = pneg %p47
        %p267 = pneg %p44
        %p268 = pneg %p68
        %p269 = pneg %p65
        %p270 = pneg %p89
        %p271 = pneg %p86
        %p272 = pneg %p110
        %p273 = pneg %p107
        %s274 = smul.u32 2, %s24
        %p275 = scmp.lt.s32.totalorder %s23, 1
        %s276 = scalar_select %p275, %s23, 1
        %p277 = scmp.lt.s32.totalorder %s274, 1
        %s278 = scalar_select %p277, %s274, 1
        %s279 = smul.addr %s276, 2
        %s280 = sadd.s32 %s278, %s279
        %s281 = smul.addr %s280, 4
        %s282 = scalar_lea.vmem %s4, %s281
        %p283 = pneg %p138
        %p284 = pneg %p135
        %p285 = pneg %p166
        %p286 = pneg %p163
        %s287 = smul.u32 2, %s24
        %p288 = scmp.lt.s32.totalorder %s23, 1
        %s289 = scalar_select %p288, %s23, 1
        %p290 = scmp.lt.s32.totalorder %s287, 1
        %s291 = scalar_select %p290, %s287, 1
        %s292 = smul.addr %s289, 2
        %s293 = sadd.s32 %s291, %s292
        %s294 = smul.addr %s293, 8
        %s295 = scalar_lea.vmem %s5, %s294
        %s296 = smul.u32 2, %s24
        %p297 = scmp.lt.s32.totalorder %s23, 1
        %s298 = scalar_select %p297, %s23, 1
        %p299 = scmp.lt.s32.totalorder %s296, 1
        %s300 = scalar_select %p299, %s296, 1
        %s301 = smul.addr %s298, 2
        %s302 = sadd.s32 %s300, %s301
        %s303 = smul.addr %s302, 4
        %s304 = scalar_lea.vmem %s4, %s303
        %s305 = smul.u32 2, %s24
        %s306 = smul.u32 2, %s24
        %p307 = scmp.lt.s32.totalorder %s23, 1
        %s308 = scalar_select %p307, %s23, 1
        %p309 = scmp.lt.s32.totalorder %s306, 1
        %s310 = scalar_select %p309, %s306, 1
        %s311 = smul.addr %s308, 2
        %s312 = sadd.s32 %s310, %s311
        %s313 = smul.addr %s312, 8
        %s314 = scalar_lea.vmem %s5, %s313
        %s315 = smul.u32 2, %s24
        %v316 = vld [vmem:[%s304] sm:$0xff]
        %s317 = sld [smem:[#allocation2]]
        %v318 = vstv %s317
        %v319 = vmul.f32 %v316, %v318
        %s320 = sld [smem:[#allocation2 + $0x1]]
        %v321 = vstv %s320
        %v322 = vmul.f32 %v316, %v321
        %v324 = vrot.slane %v322, 5
        %v325 = vrot.slane %v324, 4
        %v327 = vadd.f32 %v319, %v325
        %s328 = sld [smem:[#allocation2 + $0x2]]
        %v329 = vstv %s328
        %v330 = vmul.f32 %v316, %v329
        %v332 = vrot.slane %v330, 6
        %v333 = vrot.slane %v332, 4
        %v335 = vadd.f32 %v327, %v333
        %s336 = sld [smem:[#allocation2 + $0x3]]
        %v337 = vstv %s336
        %v338 = vmul.f32 %v316, %v337
        %v340 = vrot.slane %v338, 7
        %v341 = vrot.slane %v340, 4
        %v343 = vadd.f32 %v335, %v341
        %s344 = sld [smem:[#allocation4]]
        %v345 = vstv %s344
        %v346 = vadd.f32 %v343, %v345
        %v347 = vmax.f32 %v346, 0.0
        %s348 = sld [smem:[#allocation2 + $0x4]]
        %v349 = vstv %s348
        %v350 = vmul.f32 %v316, %v349
        %s351 = sld [smem:[#allocation2 + $0x5]]
        %v352 = vstv %s351
        %v353 = vmul.f32 %v316, %v352
        %v355 = vrot.slane %v353, 5
        %v356 = vrot.slane %v355, 4
        %v358 = vadd.f32 %v350, %v356
        %s359 = sld [smem:[#allocation2 + $0x6]]
        %v360 = vstv %s359
        %v361 = vmul.f32 %v316, %v360
        %v363 = vrot.slane %v361, 6
        %v364 = vrot.slane %v363, 4
        %v366 = vadd.f32 %v358, %v364
        %s367 = sld [smem:[#allocation2 + $0x7]]
        %v368 = vstv %s367
        %v369 = vmul.f32 %v316, %v368
        %v371 = vrot.slane %v369, 7
        %v372 = vrot.slane %v371, 4
        %v374 = vadd.f32 %v366, %v372
        %s375 = sld [smem:[#allocation4 + $0x1]]
        %v376 = vstv %s375
        %v377 = vadd.f32 %v374, %v376
        %v378 = vmax.f32 %v377, 0.0
        %s379 = sld [smem:[#allocation2 + $0x8]]
        %v380 = vstv %s379
        %v381 = vmul.f32 %v316, %v380
        %s382 = sld [smem:[#allocation2 + $0x9]]
        %v383 = vstv %s382
        %v384 = vmul.f32 %v316, %v383
        %v386 = vrot.slane %v384, 5
        %v387 = vrot.slane %v386, 4
        %v389 = vadd.f32 %v381, %v387
        %s390 = sld [smem:[#allocation2 + $0xa]]
        %v391 = vstv %s390
        %v392 = vmul.f32 %v316, %v391
        %v394 = vrot.slane %v392, 6
        %v395 = vrot.slane %v394, 4
        %v397 = vadd.f32 %v389, %v395
        %s398 = sld [smem:[#allocation2 + $0xb]]
        %v399 = vstv %s398
        %v400 = vmul.f32 %v316, %v399
        %v402 = vrot.slane %v400, 7
        %v403 = vrot.slane %v402, 4
        %v405 = vadd.f32 %v397, %v403
        %s406 = sld [smem:[#allocation4 + $0x2]]
        %v407 = vstv %s406
        %v408 = vadd.f32 %v405, %v407
        %v409 = vmax.f32 %v408, 0.0
        %s410 = sld [smem:[#allocation2 + $0xc]]
        %v411 = vstv %s410
        %v412 = vmul.f32 %v316, %v411
        %s413 = sld [smem:[#allocation2 + $0xd]]
        %v414 = vstv %s413
        %v415 = vmul.f32 %v316, %v414
        %v417 = vrot.slane %v415, 5
        %v418 = vrot.slane %v417, 4
        %v420 = vadd.f32 %v412, %v418
        %s421 = sld [smem:[#allocation2 + $0xe]]
        %v422 = vstv %s421
        %v423 = vmul.f32 %v316, %v422
        %v425 = vrot.slane %v423, 6
        %v426 = vrot.slane %v425, 4
        %v428 = vadd.f32 %v420, %v426
        %s429 = sld [smem:[#allocation2 + $0xf]]
        %v430 = vstv %s429
        %v431 = vmul.f32 %v316, %v430
        %v433 = vrot.slane %v431, 7
        %v434 = vrot.slane %v433, 4
        %v436 = vadd.f32 %v428, %v434
        %s437 = sld [smem:[#allocation4 + $0x3]]
        %v438 = vstv %s437
        %v439 = vadd.f32 %v436, %v438
        %v440 = vmax.f32 %v439, 0.0
        %s441 = sld [smem:[#allocation2 + $0x10]]
        %v442 = vstv %s441
        %v443 = vmul.f32 %v316, %v442
        %s444 = sld [smem:[#allocation2 + $0x11]]
        %v445 = vstv %s444
        %v446 = vmul.f32 %v316, %v445
        %v448 = vrot.slane %v446, 5
        %v449 = vrot.slane %v448, 4
        %v451 = vadd.f32 %v443, %v449
        %s452 = sld [smem:[#allocation2 + $0x12]]
        %v453 = vstv %s452
        %v454 = vmul.f32 %v316, %v453
        %v456 = vrot.slane %v454, 6
        %v457 = vrot.slane %v456, 4
        %v459 = vadd.f32 %v451, %v457
        %s460 = sld [smem:[#allocation2 + $0x13]]
        %v461 = vstv %s460
        %v462 = vmul.f32 %v316, %v461
        %v464 = vrot.slane %v462, 7
        %v465 = vrot.slane %v464, 4
        %v467 = vadd.f32 %v459, %v465
        %s468 = sld [smem:[#allocation4 + $0x4]]
        %v469 = vstv %s468
        %v470 = vadd.f32 %v467, %v469
        %v471 = vmax.f32 %v470, 0.0
        %s472 = sld [smem:[#allocation2 + $0x14]]
        %v473 = vstv %s472
        %v474 = vmul.f32 %v316, %v473
        %s475 = sld [smem:[#allocation2 + $0x15]]
        %v476 = vstv %s475
        %v477 = vmul.f32 %v316, %v476
        %v479 = vrot.slane %v477, 5
        %v480 = vrot.slane %v479, 4
        %v482 = vadd.f32 %v474, %v480
        %s483 = sld [smem:[#allocation2 + $0x16]]
        %v484 = vstv %s483
        %v485 = vmul.f32 %v316, %v484
        %v487 = vrot.slane %v485, 6
        %v488 = vrot.slane %v487, 4
        %v490 = vadd.f32 %v482, %v488
        %s491 = sld [smem:[#allocation2 + $0x17]]
        %v492 = vstv %s491
        %v493 = vmul.f32 %v316, %v492
        %v495 = vrot.slane %v493, 7
        %v496 = vrot.slane %v495, 4
        %v498 = vadd.f32 %v490, %v496
        %s499 = sld [smem:[#allocation4 + $0x5]]
        %v500 = vstv %s499
        %v501 = vadd.f32 %v498, %v500
        %v502 = vmax.f32 %v501, 0.0
        %s503 = sld [smem:[#allocation2 + $0x18]]
        %v504 = vstv %s503
        %v505 = vmul.f32 %v316, %v504
        %s506 = sld [smem:[#allocation2 + $0x19]]
        %v507 = vstv %s506
        %v508 = vmul.f32 %v316, %v507
        %v510 = vrot.slane %v508, 5
        %v511 = vrot.slane %v510, 4
        %v513 = vadd.f32 %v505, %v511
        %s514 = sld [smem:[#allocation2 + $0x1a]]
        %v515 = vstv %s514
        %v516 = vmul.f32 %v316, %v515
        %v518 = vrot.slane %v516, 6
        %v519 = vrot.slane %v518, 4
        %v521 = vadd.f32 %v513, %v519
        %s522 = sld [smem:[#allocation2 + $0x1b]]
        %v523 = vstv %s522
        %v524 = vmul.f32 %v316, %v523
        %v526 = vrot.slane %v524, 7
        %v527 = vrot.slane %v526, 4
        %v529 = vadd.f32 %v521, %v527
        %s530 = sld [smem:[#allocation4 + $0x6]]
        %v531 = vstv %s530
        %v532 = vadd.f32 %v529, %v531
        %v533 = vmax.f32 %v532, 0.0
        %s534 = sld [smem:[#allocation2 + $0x1c]]
        %v535 = vstv %s534
        %v536 = vmul.f32 %v316, %v535
        %s537 = sld [smem:[#allocation2 + $0x1d]]
        %v538 = vstv %s537
        %v539 = vmul.f32 %v316, %v538
        %v541 = vrot.slane %v539, 5
        %v542 = vrot.slane %v541, 4
        %v544 = vadd.f32 %v536, %v542
        %s545 = sld [smem:[#allocation2 + $0x1e]]
        %v546 = vstv %s545
        %v547 = vmul.f32 %v316, %v546
        %v549 = vrot.slane %v547, 6
        %v550 = vrot.slane %v549, 4
        %v552 = vadd.f32 %v544, %v550
        %s553 = sld [smem:[#allocation2 + $0x1f]]
        %v554 = vstv %s553
        %v555 = vmul.f32 %v316, %v554
        %v557 = vrot.slane %v555, 7
        %v558 = vrot.slane %v557, 4
        %v560 = vadd.f32 %v552, %v558
        %s561 = sld [smem:[#allocation4 + $0x7]]
        %v562 = vstv %s561
        %v563 = vadd.f32 %v560, %v562
        %v564 = vmax.f32 %v563, 0.0
        %s565 = sld [smem:[#allocation6]]
        %v566 = vstv %s565
        %v567 = vmul.f32 %v347, %v566
        %s568 = sld [smem:[#allocation6 + $0x1]]
        %v569 = vstv %s568
        %v570 = vmul.f32 %v378, %v569
        %v571 = vadd.f32 %v567, %v570
        %s572 = sld [smem:[#allocation6 + $0x2]]
        %v573 = vstv %s572
        %v574 = vmul.f32 %v409, %v573
        %v575 = vadd.f32 %v571, %v574
        %s576 = sld [smem:[#allocation6 + $0x3]]
        %v577 = vstv %s576
        %v578 = vmul.f32 %v440, %v577
        %v579 = vadd.f32 %v575, %v578
        %s580 = sld [smem:[#allocation6 + $0x4]]
        %v581 = vstv %s580
        %v582 = vmul.f32 %v471, %v581
        %v583 = vadd.f32 %v579, %v582
        %s584 = sld [smem:[#allocation6 + $0x5]]
        %v585 = vstv %s584
        %v586 = vmul.f32 %v502, %v585
        %v587 = vadd.f32 %v583, %v586
        %s588 = sld [smem:[#allocation6 + $0x6]]
        %v589 = vstv %s588
        %v590 = vmul.f32 %v533, %v589
        %v591 = vadd.f32 %v587, %v590
        %s592 = sld [smem:[#allocation6 + $0x7]]
        %v593 = vstv %s592
        %v594 = vmul.f32 %v564, %v593
        %v595 = vadd.f32 %v591, %v594
        %s596 = sld [smem:[#allocation7]]
        %v597 = vstv %s596
        %v598 = vadd.f32 %v595, %v597
        %s599 = sld [smem:[#allocation6 + $0x8]]
        %v600 = vstv %s599
        %v601 = vmul.f32 %v347, %v600
        %s602 = sld [smem:[#allocation6 + $0x9]]
        %v603 = vstv %s602
        %v604 = vmul.f32 %v378, %v603
        %v605 = vadd.f32 %v601, %v604
        %s606 = sld [smem:[#allocation6 + $0xa]]
        %v607 = vstv %s606
        %v608 = vmul.f32 %v409, %v607
        %v609 = vadd.f32 %v605, %v608
        %s610 = sld [smem:[#allocation6 + $0xb]]
        %v611 = vstv %s610
        %v612 = vmul.f32 %v440, %v611
        %v613 = vadd.f32 %v609, %v612
        %s614 = sld [smem:[#allocation6 + $0xc]]
        %v615 = vstv %s614
        %v616 = vmul.f32 %v471, %v615
        %v617 = vadd.f32 %v613, %v616
        %s618 = sld [smem:[#allocation6 + $0xd]]
        %v619 = vstv %s618
        %v620 = vmul.f32 %v502, %v619
        %v621 = vadd.f32 %v617, %v620
        %s622 = sld [smem:[#allocation6 + $0xe]]
        %v623 = vstv %s622
        %v624 = vmul.f32 %v533, %v623
        %v625 = vadd.f32 %v621, %v624
        %s626 = sld [smem:[#allocation6 + $0xf]]
        %v627 = vstv %s626
        %v628 = vmul.f32 %v564, %v627
        %v629 = vadd.f32 %v625, %v628
        %s630 = sld [smem:[#allocation7 + $0x1]]
        %v631 = vstv %s630
        %v632 = vadd.f32 %v629, %v631
        %s633 = sld [smem:[#allocation6 + $0x10]]
        %v634 = vstv %s633
        %v635 = vmul.f32 %v347, %v634
        %s636 = sld [smem:[#allocation6 + $0x11]]
        %v637 = vstv %s636
        %v638 = vmul.f32 %v378, %v637
        %v639 = vadd.f32 %v635, %v638
        %s640 = sld [smem:[#allocation6 + $0x12]]
        %v641 = vstv %s640
        %v642 = vmul.f32 %v409, %v641
        %v643 = vadd.f32 %v639, %v642
        %s644 = sld [smem:[#allocation6 + $0x13]]
        %v645 = vstv %s644
        %v646 = vmul.f32 %v440, %v645
        %v647 = vadd.f32 %v643, %v646
        %s648 = sld [smem:[#allocation6 + $0x14]]
        %v649 = vstv %s648
        %v650 = vmul.f32 %v471, %v649
        %v651 = vadd.f32 %v647, %v650
        %s652 = sld [smem:[#allocation6 + $0x15]]
        %v653 = vstv %s652
        %v654 = vmul.f32 %v502, %v653
        %v655 = vadd.f32 %v651, %v654
        %s656 = sld [smem:[#allocation6 + $0x16]]
        %v657 = vstv %s656
        %v658 = vmul.f32 %v533, %v657
        %v659 = vadd.f32 %v655, %v658
        %s660 = sld [smem:[#allocation6 + $0x17]]
        %v661 = vstv %s660
        %v662 = vmul.f32 %v564, %v661
        %v663 = vadd.f32 %v659, %v662
        %s664 = sld [smem:[#allocation7 + $0x2]]
        %v665 = vstv %s664
        %v666 = vadd.f32 %v663, %v665
        %s667 = sld [smem:[#allocation6 + $0x18]]
        %v668 = vstv %s667
        %v669 = vmul.f32 %v347, %v668
        %s670 = sld [smem:[#allocation6 + $0x19]]
        %v671 = vstv %s670
        %v672 = vmul.f32 %v378, %v671
        %v673 = vadd.f32 %v669, %v672
        %s674 = sld [smem:[#allocation6 + $0x1a]]
        %v675 = vstv %s674
        %v676 = vmul.f32 %v409, %v675
        %v677 = vadd.f32 %v673, %v676
        %s678 = sld [smem:[#allocation6 + $0x1b]]
        %v679 = vstv %s678
        %v680 = vmul.f32 %v440, %v679
        %v681 = vadd.f32 %v677, %v680
        %s682 = sld [smem:[#allocation6 + $0x1c]]
        %v683 = vstv %s682
        %v684 = vmul.f32 %v471, %v683
        %v685 = vadd.f32 %v681, %v684
        %s686 = sld [smem:[#allocation6 + $0x1d]]
        %v687 = vstv %s686
        %v688 = vmul.f32 %v502, %v687
        %v689 = vadd.f32 %v685, %v688
        %s690 = sld [smem:[#allocation6 + $0x1e]]
        %v691 = vstv %s690
        %v692 = vmul.f32 %v533, %v691
        %v693 = vadd.f32 %v689, %v692
        %s694 = sld [smem:[#allocation6 + $0x1f]]
        %v695 = vstv %s694
        %v696 = vmul.f32 %v564, %v695
        %v697 = vadd.f32 %v693, %v696
        %s698 = sld [smem:[#allocation7 + $0x3]]
        %v699 = vstv %s698
        %v700 = vadd.f32 %v697, %v699
        %s701 = sld [smem:[#allocation6 + $0x20]]
        %v702 = vstv %s701
        %v703 = vmul.f32 %v347, %v702
        %s704 = sld [smem:[#allocation6 + $0x21]]
        %v705 = vstv %s704
        %v706 = vmul.f32 %v378, %v705
        %v707 = vadd.f32 %v703, %v706
        %s708 = sld [smem:[#allocation6 + $0x22]]
        %v709 = vstv %s708
        %v710 = vmul.f32 %v409, %v709
        %v711 = vadd.f32 %v707, %v710
        %s712 = sld [smem:[#allocation6 + $0x23]]
        %v713 = vstv %s712
        %v714 = vmul.f32 %v440, %v713
        %v715 = vadd.f32 %v711, %v714
        %s716 = sld [smem:[#allocation6 + $0x24]]
        %v717 = vstv %s716
        %v718 = vmul.f32 %v471, %v717
        %v719 = vadd.f32 %v715, %v718
        %s720 = sld [smem:[#allocation6 + $0x25]]
        %v721 = vstv %s720
        %v722 = vmul.f32 %v502, %v721
        %v723 = vadd.f32 %v719, %v722
        %s724 = sld [smem:[#allocation6 + $0x26]]
        %v725 = vstv %s724
        %v726 = vmul.f32 %v533, %v725
        %v727 = vadd.f32 %v723, %v726
        %s728 = sld [smem:[#allocation6 + $0x27]]
        %v729 = vstv %s728
        %v730 = vmul.f32 %v564, %v729
        %v731 = vadd.f32 %v727, %v730
        %s732 = sld [smem:[#allocation7 + $0x4]]
        %v733 = vstv %s732
        %v734 = vadd.f32 %v731, %v733
        %s735 = sld [smem:[#allocation6 + $0x28]]
        %v736 = vstv %s735
        %v737 = vmul.f32 %v347, %v736
        %s738 = sld [smem:[#allocation6 + $0x29]]
        %v739 = vstv %s738
        %v740 = vmul.f32 %v378, %v739
        %v741 = vadd.f32 %v737, %v740
        %s742 = sld [smem:[#allocation6 + $0x2a]]
        %v743 = vstv %s742
        %v744 = vmul.f32 %v409, %v743
        %v745 = vadd.f32 %v741, %v744
        %s746 = sld [smem:[#allocation6 + $0x2b]]
        %v747 = vstv %s746
        %v748 = vmul.f32 %v440, %v747
        %v749 = vadd.f32 %v745, %v748
        %s750 = sld [smem:[#allocation6 + $0x2c]]
        %v751 = vstv %s750
        %v752 = vmul.f32 %v471, %v751
        %v753 = vadd.f32 %v749, %v752
        %s754 = sld [smem:[#allocation6 + $0x2d]]
        %v755 = vstv %s754
        %v756 = vmul.f32 %v502, %v755
        %v757 = vadd.f32 %v753, %v756
        %s758 = sld [smem:[#allocation6 + $0x2e]]
        %v759 = vstv %s758
        %v760 = vmul.f32 %v533, %v759
        %v761 = vadd.f32 %v757, %v760
        %s762 = sld [smem:[#allocation6 + $0x2f]]
        %v763 = vstv %s762
        %v764 = vmul.f32 %v564, %v763
        %v765 = vadd.f32 %v761, %v764
        %s766 = sld [smem:[#allocation7 + $0x5]]
        %v767 = vstv %s766
        %v768 = vadd.f32 %v765, %v767
        %s769 = sld [smem:[#allocation6 + $0x30]]
        %v770 = vstv %s769
        %v771 = vmul.f32 %v347, %v770
        %s772 = sld [smem:[#allocation6 + $0x31]]
        %v773 = vstv %s772
        %v774 = vmul.f32 %v378, %v773
        %v775 = vadd.f32 %v771, %v774
        %s776 = sld [smem:[#allocation6 + $0x32]]
        %v777 = vstv %s776
        %v778 = vmul.f32 %v409, %v777
        %v779 = vadd.f32 %v775, %v778
        %s780 = sld [smem:[#allocation6 + $0x33]]
        %v781 = vstv %s780
        %v782 = vmul.f32 %v440, %v781
        %v783 = vadd.f32 %v779, %v782
        %s784 = sld [smem:[#allocation6 + $0x34]]
        %v785 = vstv %s784
        %v786 = vmul.f32 %v471, %v785
        %v787 = vadd.f32 %v783, %v786
        %s788 = sld [smem:[#allocation6 + $0x35]]
        %v789 = vstv %s788
        %v790 = vmul.f32 %v502, %v789
        %v791 = vadd.f32 %v787, %v790
        %s792 = sld [smem:[#allocation6 + $0x36]]
        %v793 = vstv %s792
        %v794 = vmul.f32 %v533, %v793
        %v795 = vadd.f32 %v791, %v794
        %s796 = sld [smem:[#allocation6 + $0x37]]
        %v797 = vstv %s796
        %v798 = vmul.f32 %v564, %v797
        %v799 = vadd.f32 %v795, %v798
        %s800 = sld [smem:[#allocation7 + $0x6]]
        %v801 = vstv %s800
        %v802 = vadd.f32 %v799, %v801
        %s803 = sld [smem:[#allocation6 + $0x38]]
        %v804 = vstv %s803
        %v805 = vmul.f32 %v347, %v804
        %s806 = sld [smem:[#allocation6 + $0x39]]
        %v807 = vstv %s806
        %v808 = vmul.f32 %v378, %v807
        %v809 = vadd.f32 %v805, %v808
        %s810 = sld [smem:[#allocation6 + $0x3a]]
        %v811 = vstv %s810
        %v812 = vmul.f32 %v409, %v811
        %v813 = vadd.f32 %v809, %v812
        %s814 = sld [smem:[#allocation6 + $0x3b]]
        %v815 = vstv %s814
        %v816 = vmul.f32 %v440, %v815
        %v817 = vadd.f32 %v813, %v816
        %s818 = sld [smem:[#allocation6 + $0x3c]]
        %v819 = vstv %s818
        %v820 = vmul.f32 %v471, %v819
        %v821 = vadd.f32 %v817, %v820
        %s822 = sld [smem:[#allocation6 + $0x3d]]
        %v823 = vstv %s822
        %v824 = vmul.f32 %v502, %v823
        %v825 = vadd.f32 %v821, %v824
        %s826 = sld [smem:[#allocation6 + $0x3e]]
        %v827 = vstv %s826
        %v828 = vmul.f32 %v533, %v827
        %v829 = vadd.f32 %v825, %v828
        %s830 = sld [smem:[#allocation6 + $0x3f]]
        %v831 = vstv %s830
        %v832 = vmul.f32 %v564, %v831
        %v833 = vadd.f32 %v829, %v832
        %s834 = sld [smem:[#allocation7 + $0x7]]
        %v835 = vstv %s834
        %v836 = vadd.f32 %v833, %v835
        %v838 = vlaneseq
        %v839 = vshrl.u32 %v838, 7
        %v840 = vsub.s32 0, %v839
        %v841 = vrot.slane %v598, %v840
        %v842 = vlaneseq
        %v843 = vshrl.u32 %v842, 7
        %v844 = vsub.s32 4, %v843
        %v845 = vrot.slane %v598, %v844
        %v849 = vlaneseq
        %v850 = vshrl.u32 %v849, 7
        %v851 = vsub.s32 0, %v850
        %v852 = vrot.slane %v632, %v851
        %v853 = vlaneseq
        %v854 = vshrl.u32 %v853, 7
        %v855 = vsub.s32 4, %v854
        %v856 = vrot.slane %v632, %v855
        %v860 = vlaneseq
        %v861 = vshrl.u32 %v860, 7
        %v862 = vsub.s32 0, %v861
        %v863 = vrot.slane %v666, %v862
        %v864 = vlaneseq
        %v865 = vshrl.u32 %v864, 7
        %v866 = vsub.s32 4, %v865
        %v867 = vrot.slane %v666, %v866
        %v871 = vlaneseq
        %v872 = vshrl.u32 %v871, 7
        %v873 = vsub.s32 0, %v872
        %v874 = vrot.slane %v700, %v873
        %v875 = vlaneseq
        %v876 = vshrl.u32 %v875, 7
        %v877 = vsub.s32 4, %v876
        %v878 = vrot.slane %v700, %v877
        %v882 = vlaneseq
        %v883 = vshrl.u32 %v882, 7
        %v884 = vsub.s32 0, %v883
        %v885 = vrot.slane %v734, %v884
        %v886 = vlaneseq
        %v887 = vshrl.u32 %v886, 7
        %v888 = vsub.s32 4, %v887
        %v889 = vrot.slane %v734, %v888
        %v893 = vlaneseq
        %v894 = vshrl.u32 %v893, 7
        %v895 = vsub.s32 0, %v894
        %v896 = vrot.slane %v768, %v895
        %v897 = vlaneseq
        %v898 = vshrl.u32 %v897, 7
        %v899 = vsub.s32 4, %v898
        %v900 = vrot.slane %v768, %v899
        %v904 = vlaneseq
        %v905 = vshrl.u32 %v904, 7
        %v906 = vsub.s32 0, %v905
        %v907 = vrot.slane %v802, %v906
        %v908 = vlaneseq
        %v909 = vshrl.u32 %v908, 7
        %v910 = vsub.s32 4, %v909
        %v911 = vrot.slane %v802, %v910
        %v915 = vlaneseq
        %v916 = vshrl.u32 %v915, 7
        %v917 = vsub.s32 0, %v916
        %v918 = vrot.slane %v836, %v917
        %v919 = vlaneseq
        %v920 = vshrl.u32 %v919, 7
        %v921 = vsub.s32 4, %v920
        %v922 = vrot.slane %v836, %v921
        %vm925 = vcmask 1040384
        %v926 = vsel %vm925, %v841, %v852
        %v927 = vsel %vm925, %v845, %v856
        %vm928 = vcmask 1041408
        %v929 = vsel %vm928, %v926, %v863
        %v930 = vsel %vm928, %v927, %v867
        %vm931 = vcmask 1042432
        %v932 = vsel %vm931, %v929, %v874
        %v933 = vsel %vm931, %v930, %v878
        %vm934 = vcmask 1043456
        %v935 = vsel %vm934, %v932, %v885
        %v936 = vsel %vm934, %v933, %v889
        %vm937 = vcmask 1044480
        %v938 = vsel %vm937, %v935, %v896
        %v939 = vsel %vm937, %v936, %v900
        %vm940 = vcmask 1045504
        %v941 = vsel %vm940, %v938, %v907
        %v942 = vsel %vm940, %v939, %v911
        %vm943 = vcmask 1046528
        %v944 = vsel %vm943, %v941, %v918
        %v945 = vsel %vm943, %v942, %v922
        %946 = vst [vmem:[%s314] sm:$0xff] %v944
        %947 = vst [vmem:[%s314 + $0x8] sm:$0xff] %v945
        %s948 = smul.u32 2, %s24
        %p949 = scmp.lt.s32.totalorder %s23, 1
        %s950 = scalar_select %p949, %s23, 1
        %p951 = scmp.lt.s32.totalorder %s948, 1
        %s952 = scalar_select %p951, %s948, 1
        %s953 = smul.addr %s950, 2
        %s954 = sadd.s32 %s952, %s953
        %s955 = smul.addr %s954, 8
        %s956 = scalar_lea.vmem %s5, %s955
        // Predicated region
        $region57: #{cnn_forward.1} parent=39 // pred_check
          %p957 = pneg %p163
        $region58: #{cnn_forward.1} parent=39 // pred_check_branch
          %959 = sbr.rel (%p957) target = $region60
        $region59: #{cnn_forward.1} parent=39 // pred_region
          %s960 = smul.u32 2, %s24
        $region60: #{cnn_forward.1} parent=39 // pred_fallthru
          _
      $region40: #{cnn_forward.1} parent=5 // pred_fallthru
        _
      %p961 = scmp.le.s32.totalorder 2, %s14
      // Predicated region
      $region61: #{cnn_forward.1} parent=5 // pred_check
        %p962 = pneg %p961
      $region62: #{cnn_forward.1} parent=5 // pred_check_branch
        %964 = sbr.rel (%p962) target = $region64
      $region63: #{cnn_forward.1} parent=5 // pred_region
        %s965 = ssub.s32 %s14, 2
        // Predicated region
        $region65: #{cnn_forward.1} parent=63 // pred_check
          %p966 = pneg %p169
        $region66: #{cnn_forward.1} parent=63 // pred_check_branch
          %968 = sbr.rel (%p966) target = $region68
        $region67: #{cnn_forward.1} parent=63 // pred_region
          %s969 = smul.u32 2, %s26
          %p970 = scmp.lt.s32.totalorder %s25, 1
          %s971 = scalar_select %p970, %s25, 1
          %p972 = scmp.lt.s32.totalorder %s969, 1
          %s973 = scalar_select %p972, %s969, 1
          %s974 = smul.addr %s971, 2
          %s975 = sadd.s32 %s973, %s974
          %s976 = smul.addr %s975, 8
          %s977 = scalar_lea.vmem %s5, %s976
        $region68: #{cnn_forward.1} parent=63 // pred_fallthru
          _
      $region64: #{cnn_forward.1} parent=5 // pred_fallthru
        _
    $region6: #{cnn_forward.1} parent=1 // loop_footer
      %s18 = sadd.s32 1, %s14
    $region7: #{cnn_forward.1} parent=1 // loop_footer_branch
      %13 = sbr.rel target = $region3
    $region8: #{cnn_forward.1} parent=1 // loop_exit
      _
    %978 = vsyncpa [#allocation3], 1
    %s979 = scalar_lea.sflag [#allocation3], 1
    %980 = vsyncpa %s979, 1
    %981 = vsyncpa [#allocation5], 1
    %982 = vsyncpa [#allocation8], 1

</llo_original>
